<compile_context>
chip_gen: v5e
topology: v5e:2x2
jax: 0.10.0
libtpu: 0.0.40
codegen_flags: <defaults>
</compile_context>

<pallas_src>
import functools
import math

import jax
import jax.numpy as jnp
from jax import lax
from jax.experimental import pallas as pl
from jax.experimental.pallas import tpu as pltpu


def _round_up(a, b):
    return ((a + b - 1) // b) * b


# ---------------------------------------------------------------------------
# Kernels
# ---------------------------------------------------------------------------
def _hop_kernel(adj_ref, p_ref, scale_ref, out_ref, acc_ref):
    """One SGC hop row-tile: acc[i] += A[i,k] @ P[k];  q_next[i] = scale[i]*acc[i]."""
    k = pl.program_id(1)
    col_tile = adj_ref.shape[1]

    @pl.when(k == 0)
    def _():
        acc_ref[...] = jnp.zeros_like(acc_ref)

    a = adj_ref[...].astype(jnp.bfloat16)            # exact 0/1 int8 -> bf16
    start = pl.multiple_of(k * col_tile, col_tile)
    p_blk = p_ref[pl.ds(start, col_tile), :]         # resident P, no re-DMA per row tile
    acc_ref[...] += jnp.dot(a, p_blk, preferred_element_type=jnp.float32)

    @pl.when(k == pl.num_programs(1) - 1)
    def _():
        out_ref[...] = (acc_ref[...] * scale_ref[...]).astype(out_ref.dtype)


def _hop_project_kernel(adj_ref, p_ref, scale_ref, w_ref, b_ref, out_ref, acc_ref):
    """Last SGC hop fused with the (lane-padded) class projection."""
    k = pl.program_id(1)
    col_tile = adj_ref.shape[1]

    @pl.when(k == 0)
    def _():
        acc_ref[...] = jnp.zeros_like(acc_ref)

    a = adj_ref[...].astype(jnp.bfloat16)
    start = pl.multiple_of(k * col_tile, col_tile)
    p_blk = p_ref[pl.ds(start, col_tile), :]
    acc_ref[...] += jnp.dot(a, p_blk, preferred_element_type=jnp.float32)

    @pl.when(k == pl.num_programs(1) - 1)
    def _():
        h = (acc_ref[...] * scale_ref[...]).astype(w_ref.dtype)
        logits = jnp.dot(h, w_ref[...], preferred_element_type=jnp.float32) + b_ref[...]
        out_ref[...] = logits.astype(out_ref.dtype)


def _compiler_params(row_tile, col_tile, n_pad, f_pad, out_pad):
    """VMEM budget derived from the actual tile footprint (fits 64 MiB v7x)."""
    est = (
        2 * row_tile * col_tile * 1                    # int8 A tiles (double-buffered)
        + row_tile * col_tile * 2                      # in-kernel bf16 copy of A tile
        + 2 * n_pad * f_pad * 2                        # resident bf16 P (x2 conservative)
        + 2 * row_tile * 128 * 4                       # per-row scale (lane-padded)
        + row_tile * f_pad * 4                         # f32 accumulator scratch
        + 2 * row_tile * max(f_pad, out_pad) * 4       # output buffers
        + 2 * (f_pad * out_pad * 2 + 128 * out_pad * 4)  # W_eff + bias
    )
    limit = int(min(max((est * 4) // 3, 32 * 1024 * 1024), 64 * 1024 * 1024))
    return pltpu.CompilerParams(
        dimension_semantics=("parallel", "arbitrary"),   # rows across TCs on v7x
        vmem_limit_bytes=limit,
    )


def _hop(adj_i8, p, inv_deg, row_tile, col_tile):
    n_pad, f_pad = p.shape
    grid = (n_pad // row_tile, n_pad // col_tile)
    return pl.pallas_call(
        _hop_kernel,
        out_shape=jax.ShapeDtypeStruct((n_pad, f_pad), jnp.bfloat16),
        grid_spec=pltpu.PrefetchScalarGridSpec(
            num_scalar_prefetch=0,
            grid=grid,
            in_specs=[
                pl.BlockSpec((row_tile, col_tile), lambda i, k: (i, k)),  # A (int8)
                pl.BlockSpec((n_pad, f_pad), lambda i, k: (0, 0)),        # P (resident)
                pl.BlockSpec((row_tile, 1), lambda i, k: (i, 0)),         # 1/deg rows
            ],
            out_specs=pl.BlockSpec((row_tile, f_pad), lambda i, k: (i, 0)),
            scratch_shapes=[pltpu.VMEM((row_tile, f_pad), jnp.float32)],
        ),
        compiler_params=_compiler_params(row_tile, col_tile, n_pad, f_pad, f_pad),
    )(adj_i8, p, inv_deg)


def _hop_project(adj_i8, p, norm, w_eff, b2, row_tile, col_tile):
    n_pad, f_pad = p.shape
    c_pad = w_eff.shape[1]
    grid = (n_pad // row_tile, n_pad // col_tile)
    return pl.pallas_call(
        _hop_project_kernel,
        out_shape=jax.ShapeDtypeStruct((n_pad, c_pad), jnp.float32),
        grid_spec=pltpu.PrefetchScalarGridSpec(
            num_scalar_prefetch=0,
            grid=grid,
            in_specs=[
                pl.BlockSpec((row_tile, col_tile), lambda i, k: (i, k)),  # A (int8)
                pl.BlockSpec((n_pad, f_pad), lambda i, k: (0, 0)),        # P (resident)
                pl.BlockSpec((row_tile, 1), lambda i, k: (i, 0)),         # D^{-1/2} rows
                pl.BlockSpec((f_pad, c_pad), lambda i, k: (0, 0)),        # W_eff
                pl.BlockSpec((1, c_pad), lambda i, k: (0, 0)),            # b2 (padded)
            ],
            out_specs=pl.BlockSpec((row_tile, c_pad), lambda i, k: (i, 0)),
            scratch_shapes=[pltpu.VMEM((row_tile, f_pad), jnp.float32)],
        ),
        compiler_params=_compiler_params(row_tile, col_tile, n_pad, f_pad, c_pad),
    )(adj_i8, p, norm, w_eff, b2)


# ---------------------------------------------------------------------------
# Static-graph preprocessing (hoisted out of the jitted forward; cache it)
# ---------------------------------------------------------------------------
def preprocess_graph(adj, *, row_tile=512, col_tile=2048):
    """One-time preprocessing of the static graph.

    adj: (N, N) dense 0/1 adjacency, adj[v, u] = 1 iff edge u -> v.
    Returns (adj_i8, norm, inv_deg, n, n_pad, row_tile, col_tile).
    """
    n = adj.shape[0]
    n_128 = _round_up(n, 128)
    row_tile = min(row_tile, n_128)
    col_tile = min(col_tile, n_128)
    n_pad = _round_up(n, math.lcm(row_tile, col_tile))

    deg = jnp.maximum(jnp.sum(adj, axis=1, keepdims=True), 1.0)   # in-deg clamp (DGL)
    norm = lax.rsqrt(deg)                                         # D^{-1/2}
    inv_deg = 1.0 / deg                                           # D^{-1}

    # Exact int8 0/1 adjacency (half the HBM stream of bf16, zero quant error).
    adj_i8 = jnp.zeros((n_pad, n_pad), jnp.int8).at[:n, :n].set(adj.astype(jnp.int8))
    norm_p = jnp.zeros((n_pad, 1), jnp.float32).at[:n, :].set(norm)
    inv_deg_p = jnp.zeros((n_pad, 1), jnp.float32).at[:n, :].set(inv_deg)
    return adj_i8, norm_p, inv_deg_p, n, n_pad, row_tile, col_tile


# ---------------------------------------------------------------------------
# Forward wrapper
# ---------------------------------------------------------------------------
def sgc_net_forward(adj_i8, norm, inv_deg, x, w1, b1, w2, b2, *,
                    k, n, n_pad, row_tile, col_tile):
    """SGCNet forward: Linear -> (eval) Dropout -> SGConv(K hops).

    Returns (n, n_classes) logits.
    """
    assert k >= 1, "SGConv expects k >= 1 hops"
    in_dim = x.shape[1]
    n_cls = w2.shape[1]
    f = in_dim + 1
    f_pad = _round_up(f, 128)          # lane-dense propagated features
    c_pad = _round_up(n_cls, 128)      # lane-dense class logits

    # Linearity: A_hat^K (x W1 + 1 b1) W2 + b2 = (A_hat^K [x|1]) ([W1;b1] W2) + b2.
    x_aug = jnp.concatenate([x, jnp.ones((n, 1), x.dtype)], axis=1)
    # The kernels carry q = D^{-1/2} h:  hops are  q <- D^{-1} (A q)  and the
    # final hop is  h_K = D^{-1/2} (A q), so fold the first D^{-1/2} here.
    q0 = norm[:n, :] * x_aug

    q = jnp.zeros((n_pad, f_pad), jnp.bfloat16).at[:n, :f].set(q0.astype(jnp.bfloat16))

    w_eff = jnp.concatenate([w1, b1], axis=0) @ w2                  # (f, n_cls) f32
    w_eff_p = jnp.zeros((f_pad, c_pad), jnp.bfloat16).at[:f, :n_cls].set(
        w_eff.astype(jnp.bfloat16))
    b2_p = jnp.zeros((1, c_pad), jnp.float32).at[:, :n_cls].set(b2)

    # ---- K-hop propagation + fused projection (Pallas). ----
    for _ in range(k - 1):
        q = _hop(adj_i8, q, inv_deg, row_tile, col_tile)
    out_p = _hop_project(adj_i8, q, norm, w_eff_p, b2_p, row_tile, col_tile)

    return out_p[:n, :n_cls]


# ---------------------------------------------------------------------------
# Demo / correctness check
# ---------------------------------------------------------------------------
if __name__ == "__main__":
    N = 512          # number of graph nodes
    IN_DIM = 64      # in_dim_node
    HIDDEN = 128     # hidden_dim
    N_CLASSES = 16   # n_classes
    K = 2            # n_layers (SGConv hops)

    key = jax.random.PRNGKey(0)
    k_x, k_a, k_w1, k_b1, k_w2, k_b2 = jax.random.split(key, 6)

    x = jax.random.normal(k_x, (N, IN_DIM), dtype=jnp.float32)

    # Deterministic random undirected graph with self loops, dense 0/1 adjacency.
    a_rand = jax.random.uniform(k_a, (N, N))
    adj = (a_rand < 0.03).astype(jnp.float32)
    adj = jnp.maximum(adj, adj.T)                              # symmetric
    adj = jnp.maximum(adj, jnp.eye(N, dtype=jnp.float32))      # self loops

    def lin_init(kw, kb, fan_in, fan_out):
        bound = 1.0 / jnp.sqrt(jnp.float32(fan_in))
        w = jax.random.uniform(kw, (fan_in, fan_out), jnp.float32, -bound, bound)
        b = jax.random.uniform(kb, (1, fan_out), jnp.float32, -bound, bound)
        return w, b

    w1, b1 = lin_init(k_w1, k_b1, IN_DIM, HIDDEN)      # embedding_h
    w2, b2 = lin_init(k_w2, k_b2, HIDDEN, N_CLASSES)   # SGConv fc

    # One-time static-graph preprocessing (cached across forwards in practice).
    # Small tiles here exercise both grid axes; defaults (512, 2048) are for
    # real WikiCS scale.
    adj_i8, norm_p, inv_deg_p, n, n_pad, rt, ct = preprocess_graph(
        adj, row_tile=256, col_tile=256)
    adj_i8, norm_p, inv_deg_p = jax.block_until_ready((adj_i8, norm_p, inv_deg_p))

    fwd = jax.jit(functools.partial(
        sgc_net_forward, k=K, n=n, n_pad=n_pad, row_tile=rt, col_tile=ct))
    out = jax.block_until_ready(fwd(adj_i8, norm_p, inv_deg_p, x, w1, b1, w2, b2))
    assert out.shape == (N, N_CLASSES)

    # --- Reference 1: same math / dtypes as the kernel (tight check). ---
    deg = jnp.maximum(adj.sum(axis=1, keepdims=True), 1.0)
    norm = 1.0 / jnp.sqrt(deg)
    inv_deg = 1.0 / deg
    adj_bf16 = adj.astype(jnp.bfloat16)                     # exact 0/1
    x_aug = jnp.concatenate([x, jnp.ones((N, 1), jnp.float32)], axis=1)
    w_eff = jnp.concatenate([w1, b1], axis=0) @ w2
    q = (norm * x_aug).astype(jnp.bfloat16)
    for _ in range(K - 1):
        acc = jnp.dot(adj_bf16, q, preferred_element_type=jnp.float32)
        q = (inv_deg * acc).astype(jnp.bfloat16)
    acc = jnp.dot(adj_bf16, q, preferred_element_type=jnp.float32)
    h_k = (norm * acc).astype(jnp.bfloat16)
    ref_bf16 = jnp.dot(h_k, w_eff.astype(jnp.bfloat16),
                       preferred_element_type=jnp.float32) + b2
    assert jnp.allclose(out, ref_bf16, atol=2e-3, rtol=2e-3), \
        float(jnp.max(jnp.abs(out - ref_bf16)))

    # --- Reference 2: original module semantics in f32 (loose, bf16 budget). ---
    h_ref = x @ w1 + b1
    for _ in range(K):
        h_ref = norm * (adj @ (norm * h_ref))
    ref_f32 = h_ref @ w2 + b2
    assert jnp.allclose(out, ref_f32, atol=3e-2, rtol=3e-2), \
        float(jnp.max(jnp.abs(out - ref_f32)))

    print("KERNEL_OK")
</pallas_src>

<mosaic_0001>
module attributes {stable_mosaic.version = 11 : i64} {
  func.func @_hop_kernel(%arg0: i32, %arg1: i32, %arg2: memref<256x256xi8, #tpu.memory_space<vmem>>, %arg3: memref<512x128xbf16, #tpu.memory_space<vmem>>, %arg4: memref<256x1xf32, #tpu.memory_space<vmem>>, %arg5: memref<256x128xbf16, #tpu.memory_space<vmem>>, %arg6: memref<256x128xf32, #tpu.memory_space<vmem>>) attributes {dimension_semantics = [#tpu.dimension_semantics<parallel>, #tpu.dimension_semantics<arbitrary>], iteration_bounds = array<i64: 2, 2>, scalar_prefetch = 0 : i64, scratch_operands = 1 : i64, tpu.core_type = #tpu.core_type<tc>, window_params = [{transform_indices = @transform_0, window_bounds = array<i64: 256, 256>}, {pipeline_mode = #tpu.pipeline_mode<synchronous>, transform_indices = @transform_1, window_bounds = array<i64: 512, 128>}, {transform_indices = @transform_2, window_bounds = array<i64: 256, 1>}, {transform_indices = @transform_3, window_bounds = array<i64: 256, 128>}]} {
    %c0_i32 = arith.constant 0 : i32
    %0 = arith.cmpi eq, %arg1, %c0_i32 : i32
    %1 = arith.extui %0 : i1 to i32
    %c0_i32_0 = arith.constant 0 : i32
    %2 = arith.cmpi ne, %1, %c0_i32_0 : i32
    scf.if %2 {
      %cst_8 = arith.constant 0.000000e+00 : f32
      %16 = vector.broadcast %cst_8 : f32 to vector<256x128xf32>
      %c0_9 = arith.constant 0 : index
      %c0_10 = arith.constant 0 : index
      %17 = vector.load %arg6[%c0_9, %c0_10] : memref<256x128xf32, #tpu.memory_space<vmem>>, vector<256x128xf32>
      tpu.vector_store %arg6[%c0_9, %c0_10], %16 {strides = array<i32>} : memref<256x128xf32, #tpu.memory_space<vmem>>, vector<256x128xf32>,
    } else {
    }
    %c0 = arith.constant 0 : index
    %c0_1 = arith.constant 0 : index
    %3 = vector.load %arg2[%c0, %c0_1] : memref<256x256xi8, #tpu.memory_space<vmem>>, vector<256x256xi8>
    %4 = arith.sitofp %3 : vector<256x256xi8> to vector<256x256xbf16>
    %c256_i32 = arith.constant 256 : i32
    %5 = arith.muli %arg1, %c256_i32 : i32
    %6 = tpu.assume_multiple %5, 256 : i32
    %7 = arith.index_cast %6 : i32 to index
    %c0_2 = arith.constant 0 : index
    %8 = vector.load %arg3[%7, %c0_2] : memref<512x128xbf16, #tpu.memory_space<vmem>>, vector<256x128xbf16>
    %c0_3 = arith.constant 0 : index
    %c0_4 = arith.constant 0 : index
    %9 = vector.load %arg6[%c0_3, %c0_4] : memref<256x128xf32, #tpu.memory_space<vmem>>, vector<256x128xf32>
    %cst = arith.constant dense<0.000000e+00> : vector<256x128xf32>
    %10 = tpu.matmul %4, %8, %cst {dimension_numbers = #tpu.dot_dimension_numbers<[1], [0], [0], [1], [0, 0, 1, 1], [], []>} : vector<256x256xbf16>, vector<256x128xbf16>, vector<256x128xf32> -> vector<256x128xf32>
    %11 = arith.addf %9, %10 : vector<256x128xf32>
    %c0_5 = arith.constant 0 : index
    %c0_6 = arith.constant 0 : index
    %12 = vector.load %arg6[%c0_5, %c0_6] : memref<256x128xf32, #tpu.memory_space<vmem>>, vector<256x128xf32>
    tpu.vector_store %arg6[%c0_5, %c0_6], %11 {strides = array<i32>} : memref<256x128xf32, #tpu.memory_space<vmem>>, vector<256x128xf32>,
    %c1_i32 = arith.constant 1 : i32
    %13 = arith.cmpi eq, %arg1, %c1_i32 : i32
    %14 = arith.extui %13 : i1 to i32
    %c0_i32_7 = arith.constant 0 : i32
    %15 = arith.cmpi ne, %14, %c0_i32_7 : i32
    scf.if %15 {
      %c0_8 = arith.constant 0 : index
      %c0_9 = arith.constant 0 : index
      %16 = vector.load %arg6[%c0_8, %c0_9] : memref<256x128xf32, #tpu.memory_space<vmem>>, vector<256x128xf32>
      %c0_10 = arith.constant 0 : index
      %c0_11 = arith.constant 0 : index
      %17 = vector.load %arg4[%c0_10, %c0_11] : memref<256x1xf32, #tpu.memory_space<vmem>>, vector<256x1xf32>
      %18 = vector.broadcast %17 : vector<256x1xf32> to vector<256x128xf32>
      %19 = arith.mulf %16, %18 : vector<256x128xf32>
      %20 = arith.truncf %19 : vector<256x128xf32> to vector<256x128xbf16>
      %c0_12 = arith.constant 0 : index
      %c0_13 = arith.constant 0 : index
      %21 = vector.load %arg5[%c0_12, %c0_13] : memref<256x128xbf16, #tpu.memory_space<vmem>>, vector<256x128xbf16>
      tpu.vector_store %arg5[%c0_12, %c0_13], %20 {strides = array<i32>} : memref<256x128xbf16, #tpu.memory_space<vmem>>, vector<256x128xbf16>,
    } else {
    }
    return
  }
  func.func @transform_0(%arg0: i32, %arg1: i32) -> (i32, i32) {
    %c0_i32 = arith.constant 0 : i32
    return %arg0, %arg1 : i32, i32
  }
  func.func @transform_1(%arg0: i32, %arg1: i32) -> (i32, i32) {
    %c0_i32 = arith.constant 0 : i32
    %c0_i32_0 = arith.constant 0 : i32
    %c0_i32_1 = arith.constant 0 : i32
    return %c0_i32, %c0_i32_0 : i32, i32
  }
  func.func @transform_2(%arg0: i32, %arg1: i32) -> (i32, i32) {
    %c0_i32 = arith.constant 0 : i32
    %c0_i32_0 = arith.constant 0 : i32
    return %arg0, %c0_i32 : i32, i32
  }
  func.func @transform_3(%arg0: i32, %arg1: i32) -> (i32, i32) {
    %c0_i32 = arith.constant 0 : i32
    %c0_i32_0 = arith.constant 0 : i32
    return %arg0, %c0_i32 : i32, i32
  }
}

module attributes {stable_mosaic.version = 11 : i64} {
  func.func @_hop_project_kernel(%arg0: i32, %arg1: i32, %arg2: memref<256x256xi8, #tpu.memory_space<vmem>>, %arg3: memref<512x128xbf16, #tpu.memory_space<vmem>>, %arg4: memref<256x1xf32, #tpu.memory_space<vmem>>, %arg5: memref<128x128xbf16, #tpu.memory_space<vmem>>, %arg6: memref<1x128xf32, #tpu.memory_space<vmem>>, %arg7: memref<256x128xf32, #tpu.memory_space<vmem>>, %arg8: memref<256x128xf32, #tpu.memory_space<vmem>>) attributes {dimension_semantics = [#tpu.dimension_semantics<parallel>, #tpu.dimension_semantics<arbitrary>], iteration_bounds = array<i64: 2, 2>, scalar_prefetch = 0 : i64, scratch_operands = 1 : i64, tpu.core_type = #tpu.core_type<tc>, window_params = [{transform_indices = @transform_0, window_bounds = array<i64: 256, 256>}, {pipeline_mode = #tpu.pipeline_mode<synchronous>, transform_indices = @transform_1, window_bounds = array<i64: 512, 128>}, {transform_indices = @transform_2, window_bounds = array<i64: 256, 1>}, {pipeline_mode = #tpu.pipeline_mode<synchronous>, transform_indices = @transform_3, window_bounds = array<i64: 128, 128>}, {pipeline_mode = #tpu.pipeline_mode<synchronous>, transform_indices = @transform_4, window_bounds = array<i64: 1, 128>}, {transform_indices = @transform_5, window_bounds = array<i64: 256, 128>}]} {
    %c0_i32 = arith.constant 0 : i32
    %0 = arith.cmpi eq, %arg1, %c0_i32 : i32
    %1 = arith.extui %0 : i1 to i32
    %c0_i32_0 = arith.constant 0 : i32
    %2 = arith.cmpi ne, %1, %c0_i32_0 : i32
    scf.if %2 {
      %cst_8 = arith.constant 0.000000e+00 : f32
      %16 = vector.broadcast %cst_8 : f32 to vector<256x128xf32>
      %c0_9 = arith.constant 0 : index
      %c0_10 = arith.constant 0 : index
      %17 = vector.load %arg8[%c0_9, %c0_10] : memref<256x128xf32, #tpu.memory_space<vmem>>, vector<256x128xf32>
      tpu.vector_store %arg8[%c0_9, %c0_10], %16 {strides = array<i32>} : memref<256x128xf32, #tpu.memory_space<vmem>>, vector<256x128xf32>,
    } else {
    }
    %c0 = arith.constant 0 : index
    %c0_1 = arith.constant 0 : index
    %3 = vector.load %arg2[%c0, %c0_1] : memref<256x256xi8, #tpu.memory_space<vmem>>, vector<256x256xi8>
    %4 = arith.sitofp %3 : vector<256x256xi8> to vector<256x256xbf16>
    %c256_i32 = arith.constant 256 : i32
    %5 = arith.muli %arg1, %c256_i32 : i32
    %6 = tpu.assume_multiple %5, 256 : i32
    %7 = arith.index_cast %6 : i32 to index
    %c0_2 = arith.constant 0 : index
    %8 = vector.load %arg3[%7, %c0_2] : memref<512x128xbf16, #tpu.memory_space<vmem>>, vector<256x128xbf16>
    %c0_3 = arith.constant 0 : index
    %c0_4 = arith.constant 0 : index
    %9 = vector.load %arg8[%c0_3, %c0_4] : memref<256x128xf32, #tpu.memory_space<vmem>>, vector<256x128xf32>
    %cst = arith.constant dense<0.000000e+00> : vector<256x128xf32>
    %10 = tpu.matmul %4, %8, %cst {dimension_numbers = #tpu.dot_dimension_numbers<[1], [0], [0], [1], [0, 0, 1, 1], [], []>} : vector<256x256xbf16>, vector<256x128xbf16>, vector<256x128xf32> -> vector<256x128xf32>
    %11 = arith.addf %9, %10 : vector<256x128xf32>
    %c0_5 = arith.constant 0 : index
    %c0_6 = arith.constant 0 : index
    %12 = vector.load %arg8[%c0_5, %c0_6] : memref<256x128xf32, #tpu.memory_space<vmem>>, vector<256x128xf32>
    tpu.vector_store %arg8[%c0_5, %c0_6], %11 {strides = array<i32>} : memref<256x128xf32, #tpu.memory_space<vmem>>, vector<256x128xf32>,
    %c1_i32 = arith.constant 1 : i32
    %13 = arith.cmpi eq, %arg1, %c1_i32 : i32
    %14 = arith.extui %13 : i1 to i32
    %c0_i32_7 = arith.constant 0 : i32
    %15 = arith.cmpi ne, %14, %c0_i32_7 : i32
    scf.if %15 {
      %c0_8 = arith.constant 0 : index
      %c0_9 = arith.constant 0 : index
      %16 = vector.load %arg8[%c0_8, %c0_9] : memref<256x128xf32, #tpu.memory_space<vmem>>, vector<256x128xf32>
      %c0_10 = arith.constant 0 : index
      %c0_11 = arith.constant 0 : index
      %17 = vector.load %arg4[%c0_10, %c0_11] : memref<256x1xf32, #tpu.memory_space<vmem>>, vector<256x1xf32>
      %18 = vector.broadcast %17 : vector<256x1xf32> to vector<256x128xf32>
      %19 = arith.mulf %16, %18 : vector<256x128xf32>
      %20 = arith.truncf %19 : vector<256x128xf32> to vector<256x128xbf16>
      %c0_12 = arith.constant 0 : index
      %c0_13 = arith.constant 0 : index
      %21 = vector.load %arg5[%c0_12, %c0_13] : memref<128x128xbf16, #tpu.memory_space<vmem>>, vector<128x128xbf16>
      %cst_14 = arith.constant dense<0.000000e+00> : vector<256x128xf32>
      %22 = tpu.matmul %20, %21, %cst_14 {dimension_numbers = #tpu.dot_dimension_numbers<[1], [0], [0], [1], [0, 0, 1, 1], [], []>} : vector<256x128xbf16>, vector<128x128xbf16>, vector<256x128xf32> -> vector<256x128xf32>
      %c0_15 = arith.constant 0 : index
      %c0_16 = arith.constant 0 : index
      %23 = vector.load %arg6[%c0_15, %c0_16] : memref<1x128xf32, #tpu.memory_space<vmem>>, vector<1x128xf32>
      %24 = vector.broadcast %23 : vector<1x128xf32> to vector<256x128xf32>
      %25 = arith.addf %22, %24 : vector<256x128xf32>
      %c0_17 = arith.constant 0 : index
      %c0_18 = arith.constant 0 : index
      %26 = vector.load %arg7[%c0_17, %c0_18] : memref<256x128xf32, #tpu.memory_space<vmem>>, vector<256x128xf32>
      tpu.vector_store %arg7[%c0_17, %c0_18], %25 {strides = array<i32>} : memref<256x128xf32, #tpu.memory_space<vmem>>, vector<256x128xf32>,
    } else {
    }
    return
  }
  func.func @transform_0(%arg0: i32, %arg1: i32) -> (i32, i32) {
    %c0_i32 = arith.constant 0 : i32
    return %arg0, %arg1 : i32, i32
  }
  func.func @transform_1(%arg0: i32, %arg1: i32) -> (i32, i32) {
    %c0_i32 = arith.constant 0 : i32
    %c0_i32_0 = arith.constant 0 : i32
    %c0_i32_1 = arith.constant 0 : i32
    return %c0_i32, %c0_i32_0 : i32, i32
  }
  func.func @transform_2(%arg0: i32, %arg1: i32) -> (i32, i32) {
    %c0_i32 = arith.constant 0 : i32
    %c0_i32_0 = arith.constant 0 : i32
    return %arg0, %c0_i32 : i32, i32
  }
  func.func @transform_3(%arg0: i32, %arg1: i32) -> (i32, i32) {
    %c0_i32 = arith.constant 0 : i32
    %c0_i32_0 = arith.constant 0 : i32
    %c0_i32_1 = arith.constant 0 : i32
    return %c0_i32, %c0_i32_0 : i32, i32
  }
  func.func @transform_4(%arg0: i32, %arg1: i32) -> (i32, i32) {
    %c0_i32 = arith.constant 0 : i32
    %c0_i32_0 = arith.constant 0 : i32
    %c0_i32_1 = arith.constant 0 : i32
    return %c0_i32, %c0_i32_0 : i32, i32
  }
  func.func @transform_5(%arg0: i32, %arg1: i32) -> (i32, i32) {
    %c0_i32 = arith.constant 0 : i32
    %c0_i32_0 = arith.constant 0 : i32
    return %arg0, %c0_i32 : i32, i32
  }
}

</mosaic_0001>

<llo_original>
// kernel: sgc_net_forward.2
$region0: #{sgc_net_forward.2}
  #allocation0 [shape = 'u32[]', space=smem, size = 0x4, offset = 0x4, fixed_abs, tag = 'smem constant byte address 0x4 - core index']
  #allocation1 [shape = 'u32[72,128]{1,0:T(1,128)}', space=vmem, size = 0x9000, scoped, tag = 'internal scratch']
  #allocation2 [shape = 'f32[256,128]{1,0:T(8,128)}', space=vmem, size = 0x20000, scoped, tag = 'scratch operand']
  %s0 = inlined_call_operand.vmem [shape: s8[512,512], index: 0, kind: input, shape index: {}]
  %s1 = inlined_call_operand.vmem [shape: bf16[512,128], index: 1, kind: input, shape index: {}]
  %s2 = inlined_call_operand.vmem [shape: f32[512,1], index: 2, kind: input, shape index: {}]
  %s3 = inlined_call_operand.vmem [shape: bf16[512,128], index: 3, kind: output, shape index: {}]
  %s4 = sld [smem:[#allocation0]]
  $region76: #{sgc_net_forward.2} parent=0
    _
  %s6 = ssub.s32 1, %s4
  %s7 = scalar_select 0, %s6, %s4
  $region1: #{sgc_net_forward.2} parent=0
    #allocation3 [shape = 'u8[131072]{0}', space=vmem, size = 0x20000, scoped, tag = 'input window, operand 0']
    loop: start=0, step=1, limit=6
    $region2: #{sgc_net_forward.2} parent=1 // loop_pre_header
      _
    $region3: #{sgc_net_forward.2} parent=1 // loop_header
      %s9 = sphi 0, %s13
      %p10 = scmp.ge.s32.totalorder %s9, 6
      %s16 = sphi 0, %s28
      %s17 = sphi 0, %s24
      %s18 = sphi 0, %s16
      %s19 = sphi 0, %s17
      %s20 = sphi 0, %s18
      %s21 = sphi 0, %s19
      %s33 = sphi 0, %s35
      %s36 = sphi 0, %s33
      %s37 = sphi 0, %s36
      %s53 = sphi 0, %s37
      %s57 = sphi 0, %s57
      %s59 = sphi 0, %s57
      %s60 = sphi 0, %s59
      %s74 = sphi 0, %s60
      %s80 = sphi 0, %s82
      %s83 = sphi 0, %s80
      %s84 = sphi 0, %s83
      %s100 = sphi 0, %s84
      %s106 = sphi 0, %s108
      %s109 = sphi 0, %s106
      %s110 = sphi 0, %s109
      %s126 = sphi 0, %s110
    $region4: #{sgc_net_forward.2} parent=1 // loop_header_branch
      %12 = sbr.rel (%p10) target = $region8
    $region5: #{sgc_net_forward.2} parent=1 // loop_body
      %s14 = ssub.s32 %s9, 1
      %s15 = ssub.s32 %s9, 2
      %s22 = sadd.s32 1, %s17
      %p23 = scmp.ge.s32.totalorder %s22, 2
      %s24 = scalar_select %p23, 0, %s22
      %s25 = sadd.s32 1, %s16
      %s26 = scalar_select %p23, %s25, %s16
      %p27 = scmp.ge.s32.totalorder %s26, 2
      %s28 = scalar_select %p27, 0, %s26
      %s29 = ssub.s32 %s16, %s28
      %s30 = ssub.s32 %s17, %s24
      %s31 = sor.u32 %s29, %s30
      %p32 = scmp.eq.s32.totalorder %s31, 0
      %s34 = sadd.s32 %s33, 1
      %s35 = scalar_select %p32, %s33, %s34
      %p38 = pneg %p32
      %p39 = scmp.eq.s32.totalorder %s9, 3
      %p40 = por %p38, %p39
      %p41 = scmp.ne.s32.totalorder %s33, %s36
      %p42 = scmp.eq.s32.totalorder %s9, 0
      %p43 = por %p41, %p42
      %p44 = scmp.ne.s32.totalorder %s33, %s36
      %p45 = scmp.eq.s32.totalorder %s14, 3
      %p46 = por %p44, %p45
      %p47 = scmp.ne.s32.totalorder %s36, %s37
      %p48 = scmp.eq.s32.totalorder %s14, 0
      %p49 = por %p47, %p48
      %p50 = scmp.ne.s32.totalorder %s36, %s37
      %p51 = scmp.eq.s32.totalorder %s15, 3
      %p52 = por %p50, %p51
      %p54 = scmp.ne.s32.totalorder %s37, %s53
      %p55 = scmp.eq.s32.totalorder %s15, 0
      %p56 = por %p54, %p55
      %s58 = sadd.s32 %s57, 1
      %p61 = scmp.eq.s32.totalorder %s9, 3
      %p62 = scmp.ne.s32.totalorder %s57, %s59
      %p63 = scmp.eq.s32.totalorder %s9, 0
      %p64 = por %p62, %p63
      %p65 = scmp.ne.s32.totalorder %s57, %s59
      %p66 = scmp.eq.s32.totalorder %s14, 3
      %p67 = por %p65, %p66
      %p68 = scmp.ne.s32.totalorder %s59, %s60
      %p69 = scmp.eq.s32.totalorder %s14, 0
      %p70 = por %p68, %p69
      %p71 = scmp.ne.s32.totalorder %s59, %s60
      %p72 = scmp.eq.s32.totalorder %s15, 3
      %p73 = por %p71, %p72
      %p75 = scmp.ne.s32.totalorder %s60, %s74
      %p76 = scmp.eq.s32.totalorder %s15, 0
      %p77 = por %p75, %p76
      %s78 = ssub.s32 %s16, %s28
      %p79 = scmp.eq.s32.totalorder %s78, 0
      %s81 = sadd.s32 %s80, 1
      %s82 = scalar_select %p79, %s80, %s81
      %p85 = pneg %p79
      %p86 = scmp.eq.s32.totalorder %s9, 3
      %p87 = por %p85, %p86
      %p88 = scmp.ne.s32.totalorder %s80, %s83
      %p89 = scmp.eq.s32.totalorder %s9, 0
      %p90 = por %p88, %p89
      %p91 = scmp.ne.s32.totalorder %s80, %s83
      %p92 = scmp.eq.s32.totalorder %s14, 3
      %p93 = por %p91, %p92
      %p94 = scmp.ne.s32.totalorder %s83, %s84
      %p95 = scmp.eq.s32.totalorder %s14, 0
      %p96 = por %p94, %p95
      %p97 = scmp.ne.s32.totalorder %s83, %s84
      %p98 = scmp.eq.s32.totalorder %s15, 3
      %p99 = por %p97, %p98
      %p101 = scmp.ne.s32.totalorder %s84, %s100
      %p102 = scmp.eq.s32.totalorder %s15, 0
      %p103 = por %p101, %p102
      %s104 = ssub.s32 %s16, %s28
      %p105 = scmp.eq.s32.totalorder %s104, 0
      %s107 = sadd.s32 %s106, 1
      %s108 = scalar_select %p105, %s106, %s107
      %p111 = pneg %p105
      %p112 = scmp.eq.s32.totalorder %s9, 3
      %p113 = por %p111, %p112
      %p114 = scmp.ne.s32.totalorder %s106, %s109
      %p115 = scmp.eq.s32.totalorder %s9, 0
      %p116 = por %p114, %p115
      %p117 = scmp.ne.s32.totalorder %s106, %s109
      %p118 = scmp.eq.s32.totalorder %s14, 3
      %p119 = por %p117, %p118
      %p120 = scmp.ne.s32.totalorder %s109, %s110
      %p121 = scmp.eq.s32.totalorder %s14, 0
      %p122 = por %p120, %p121
      %p123 = scmp.ne.s32.totalorder %s109, %s110
      %p124 = scmp.eq.s32.totalorder %s15, 3
      %p125 = por %p123, %p124
      %p127 = scmp.ne.s32.totalorder %s110, %s126
      %p128 = scmp.eq.s32.totalorder %s15, 0
      %p129 = por %p127, %p128
      %p130 = scmp.le.s32.totalorder 1, %s9
      %p131 = scmp.lt.s32.totalorder %s9, 5
      %p132 = pnand %p130, %p131
      %p133 = pneg %p132
      // Predicated region
      $region9: #{sgc_net_forward.2} parent=5 // pred_check
        _
      $region10: #{sgc_net_forward.2} parent=5 // pred_check_branch
        %135 = sbr.rel (%p132) target = $region12
      $region11: #{sgc_net_forward.2} parent=5 // pred_region
        %s136 = ssub.s32 %s9, 1
        // Predicated region
        $region13: #{sgc_net_forward.2} parent=11 // pred_check
          %p137 = pneg %p70
        $region14: #{sgc_net_forward.2} parent=11 // pred_check_branch
          %139 = sbr.rel (%p137) target = $region16
        $region15: #{sgc_net_forward.2} parent=11 // pred_region
          _
        $region16: #{sgc_net_forward.2} parent=11 // pred_fallthru
          _
      $region12: #{sgc_net_forward.2} parent=5 // pred_fallthru
        _
      %p140 = scmp.lt.s32.totalorder %s9, 4
      // Predicated region
      $region17: #{sgc_net_forward.2} parent=5 // pred_check
        %p141 = pneg %p140
      $region18: #{sgc_net_forward.2} parent=5 // pred_check_branch
        %143 = sbr.rel (%p141) target = $region20
      $region19: #{sgc_net_forward.2} parent=5 // pred_region
        // Predicated region
        $region21: #{sgc_net_forward.2} parent=19 // pred_check
          %p144 = pneg %p43
        $region22: #{sgc_net_forward.2} parent=19 // pred_check_branch
          %146 = sbr.rel (%p144) target = $region24
        $region23: #{sgc_net_forward.2} parent=19 // pred_region
          %s147 = sand.u32 %s33, 1
          %s148 = sand.u32 %s33, 1
          %s149 = smul.addr %s148, 128
          %s150 = scalar_lea.vmem [#allocation3], %s149
          %s151 = smul.u32 8, %s16
          %s152 = smul.u32 2, %s17
          %s153 = smul.addr %s151, 4
          %s154 = sadd.s32 %s152, %s153
          %s155 = smul.addr %s154, 8
          %s156 = scalar_lea.vmem %s0, %s155
          // Predicated region
          $region25: #{sgc_net_forward.2} parent=23 // pred_check
            _
          $region26: #{sgc_net_forward.2} parent=23 // pred_check_branch
            %158 = sbr.rel (0) target = $region28
          $region27: #{sgc_net_forward.2} parent=23 // pred_region
            // Predicated region
            $region29: #{sgc_net_forward.2} parent=27 // pred_check
              _
            $region30: #{sgc_net_forward.2} parent=27 // pred_check_branch
              %160 = sbr.rel (0) target = $region32
            $region31: #{sgc_net_forward.2} parent=27 // pred_region
              loop: start=0, step=1, limit=1
              $region33: #{sgc_net_forward.2} parent=31 // loop_pre_header
                _
              $region34: #{sgc_net_forward.2} parent=31 // loop_header
                %s162 = sphi 0, %s166
                %p163 = scmp.ge.s32.totalorder %s162, 1
                %s167 = sphi %s156, %s156
                %s168 = sphi %s150, %s150
              $region35: #{sgc_net_forward.2} parent=31 // loop_header_branch
                %165 = sbr.rel (%p163) target = $region39
              $region36: #{sgc_net_forward.2} parent=31 // loop_body
                %v169 = vld [vmem:[%s167] sm:$0xff]
                %170 = vst [vmem:[%s168] sm:$0xff] %v169
                %v171 = vld [vmem:[%s167 + $0x8] sm:$0xff]
                %172 = vst [vmem:[%s168 + $0x8] sm:$0xff] %v171
                %v173 = vld [vmem:[%s167 + $0x20] sm:$0xff]
                %174 = vst [vmem:[%s168 + $0x10] sm:$0xff] %v173
                %v175 = vld [vmem:[%s167 + $0x28] sm:$0xff]
                %176 = vst [vmem:[%s168 + $0x18] sm:$0xff] %v175
                %v177 = vld [vmem:[%s167 + $0x40] sm:$0xff]
                %178 = vst [vmem:[%s168 + $0x20] sm:$0xff] %v177
                %v179 = vld [vmem:[%s167 + $0x48] sm:$0xff]
                %180 = vst [vmem:[%s168 + $0x28] sm:$0xff] %v179
                %v181 = vld [vmem:[%s167 + $0x60] sm:$0xff]
                %182 = vst [vmem:[%s168 + $0x30] sm:$0xff] %v181
                %v183 = vld [vmem:[%s167 + $0x68] sm:$0xff]
                %184 = vst [vmem:[%s168 + $0x38] sm:$0xff] %v183
                %v185 = vld [vmem:[%s167 + $0x80] sm:$0xff]
                %186 = vst [vmem:[%s168 + $0x40] sm:$0xff] %v185
                %v187 = vld [vmem:[%s167 + $0x88] sm:$0xff]
                %188 = vst [vmem:[%s168 + $0x48] sm:$0xff] %v187
                %v189 = vld [vmem:[%s167 + $0xa0] sm:$0xff]
                %190 = vst [vmem:[%s168 + $0x50] sm:$0xff] %v189
                %v191 = vld [vmem:[%s167 + $0xa8] sm:$0xff]
                %192 = vst [vmem:[%s168 + $0x58] sm:$0xff] %v191
                %v193 = vld [vmem:[%s167 + $0xc0] sm:$0xff]
                %194 = vst [vmem:[%s168 + $0x60] sm:$0xff] %v193
                %v195 = vld [vmem:[%s167 + $0xc8] sm:$0xff]
                %196 = vst [vmem:[%s168 + $0x68] sm:$0xff] %v195
                %v197 = vld [vmem:[%s167 + $0xe0] sm:$0xff]
                %198 = vst [vmem:[%s168 + $0x70] sm:$0xff] %v197
                %v199 = vld [vmem:[%s167 + $0xe8] sm:$0xff]
                %200 = vst [vmem:[%s168 + $0x78] sm:$0xff] %v199
              $region37: #{sgc_net_forward.2} parent=31 // loop_footer
                %s166 = sadd.s32 1, %s162
              $region38: #{sgc_net_forward.2} parent=31 // loop_footer_branch
                %161 = sbr.rel target = $region34
              $region39: #{sgc_net_forward.2} parent=31 // loop_exit
                _
            $region32: #{sgc_net_forward.2} parent=27 // pred_fallthru
              _
            // Predicated region
            $region40: #{sgc_net_forward.2} parent=27 // pred_check
              _
            $region41: #{sgc_net_forward.2} parent=27 // pred_check_branch
              %202 = sbr.rel target = $region43
            $region42: #{sgc_net_forward.2} parent=27 // pred_region
              _
            $region43: #{sgc_net_forward.2} parent=27 // pred_fallthru
              _
          $region28: #{sgc_net_forward.2} parent=23 // pred_fallthru
            _
          %203 = vnop
        $region24: #{sgc_net_forward.2} parent=19 // pred_fallthru
          _
        // Predicated region
        $region44: #{sgc_net_forward.2} parent=19 // pred_check
          %p204 = pneg %p90
        $region45: #{sgc_net_forward.2} parent=19 // pred_check_branch
          %206 = sbr.rel (%p204) target = $region47
        $region46: #{sgc_net_forward.2} parent=19 // pred_region
          %s207 = smul.u32 32, %s16
          %p208 = scmp.lt.s32.totalorder %s207, 63
          %s209 = scalar_select %p208, %s207, 63
          %s210 = smul.addr %s209, 8
          %s211 = scalar_lea.vmem %s2, %s210
          %s212 = smul.u32 32, %s16
        $region47: #{sgc_net_forward.2} parent=19 // pred_fallthru
          _
      $region20: #{sgc_net_forward.2} parent=5 // pred_fallthru
        _
      %p213 = scmp.le.s32.totalorder 1, %s9
      %p214 = scmp.lt.s32.totalorder %s9, 5
      %p215 = pnand %p213, %p214
      %p216 = pneg %p215
      // Predicated region
      $region48: #{sgc_net_forward.2} parent=5 // pred_check
        _
      $region49: #{sgc_net_forward.2} parent=5 // pred_check_branch
        %218 = sbr.rel (%p215) target = $region51
      $region50: #{sgc_net_forward.2} parent=5 // pred_region
        %s219 = ssub.s32 %s9, 1
        %s220 = sand.u32 %s36, 1
        %s221 = sand.u32 %s36, 1
        %s222 = smul.addr %s221, 128
        %s223 = scalar_lea.vmem [#allocation3], %s222
        // Predicated region
        $region52: #{sgc_net_forward.2} parent=50 // pred_check
          %p224 = pneg %p49
        $region53: #{sgc_net_forward.2} parent=50 // pred_check_branch
          %226 = sbr.rel (%p224) target = $region55
        $region54: #{sgc_net_forward.2} parent=50 // pred_region
          _
        $region55: #{sgc_net_forward.2} parent=50 // pred_fallthru
          _
        %s227 = sand.u32 %s36, 1
        %s228 = sand.u32 %s36, 1
        %s229 = smul.addr %s228, 128
        %s230 = scalar_lea.vmem [#allocation3], %s229
        %p231 = pneg %p49
        %p232 = pneg %p46
        %p233 = pneg %p70
        %p234 = pneg %p67
        %s235 = smul.u32 32, %s18
        %p236 = scmp.lt.s32.totalorder %s235, 63
        %s237 = scalar_select %p236, %s235, 63
        %s238 = smul.addr %s237, 8
        %s239 = scalar_lea.vmem %s2, %s238
        %p240 = pneg %p96
        %p241 = pneg %p93
        %p242 = pneg %p122
        %p243 = pneg %p119
        %s244 = smul.u32 32, %s18
        %p245 = scmp.lt.s32.totalorder %s244, 63
        %s246 = scalar_select %p245, %s244, 63
        %s247 = smul.addr %s246, 4
        %s248 = scalar_lea.vmem %s3, %s247
        %s249 = smul.u32 8, %s18
        %s250 = smul.u32 2, %s19
        %s251 = smul.u32 32, %s18
        %p252 = scmp.lt.s32.totalorder %s251, 63
        %s253 = scalar_select %p252, %s251, 63
        %s254 = smul.addr %s253, 8
        %s255 = scalar_lea.vmem %s2, %s254
        %s256 = smul.u32 32, %s18
        %s257 = smul.u32 32, %s18
        %p258 = scmp.lt.s32.totalorder %s257, 63
        %s259 = scalar_select %p258, %s257, 63
        %s260 = smul.addr %s259, 4
        %s261 = scalar_lea.vmem %s3, %s260
        %s262 = smul.u32 32, %s18
        %p263 = scmp.eq.s32.totalorder %s19, 0
        // Predicated region
        $region56: #{sgc_net_forward.2} parent=50 // pred_check
          %p264 = pneg %p263
        $region57: #{sgc_net_forward.2} parent=50 // pred_check_branch
          %266 = sbr.rel (%p264) target = $region59
        $region58: #{sgc_net_forward.2} parent=50 // pred_region
          %267 = vst [vmem:[#allocation2] sm:$0xff] 0.0
          %268 = vst [vmem:[#allocation2 + $0x8] sm:$0xff] 0.0
          %269 = vst [vmem:[#allocation2 + $0x10] sm:$0xff] 0.0
          %270 = vst [vmem:[#allocation2 + $0x18] sm:$0xff] 0.0
          %271 = vst [vmem:[#allocation2 + $0x20] sm:$0xff] 0.0
          %272 = vst [vmem:[#allocation2 + $0x28] sm:$0xff] 0.0
          %273 = vst [vmem:[#allocation2 + $0x30] sm:$0xff] 0.0
          %274 = vst [vmem:[#allocation2 + $0x38] sm:$0xff] 0.0
          %275 = vst [vmem:[#allocation2 + $0x40] sm:$0xff] 0.0
          %276 = vst [vmem:[#allocation2 + $0x48] sm:$0xff] 0.0
          %277 = vst [vmem:[#allocation2 + $0x50] sm:$0xff] 0.0
          %278 = vst [vmem:[#allocation2 + $0x58] sm:$0xff] 0.0
          %279 = vst [vmem:[#allocation2 + $0x60] sm:$0xff] 0.0
          %280 = vst [vmem:[#allocation2 + $0x68] sm:$0xff] 0.0
          %281 = vst [vmem:[#allocation2 + $0x70] sm:$0xff] 0.0
          %282 = vst [vmem:[#allocation2 + $0x78] sm:$0xff] 0.0
          %283 = vst [vmem:[#allocation2 + $0x80] sm:$0xff] 0.0
          %284 = vst [vmem:[#allocation2 + $0x88] sm:$0xff] 0.0
          %285 = vst [vmem:[#allocation2 + $0x90] sm:$0xff] 0.0
          %286 = vst [vmem:[#allocation2 + $0x98] sm:$0xff] 0.0
          %287 = vst [vmem:[#allocation2 + $0xa0] sm:$0xff] 0.0
          %288 = vst [vmem:[#allocation2 + $0xa8] sm:$0xff] 0.0
          %289 = vst [vmem:[#allocation2 + $0xb0] sm:$0xff] 0.0
          %290 = vst [vmem:[#allocation2 + $0xb8] sm:$0xff] 0.0
          %291 = vst [vmem:[#allocation2 + $0xc0] sm:$0xff] 0.0
          %292 = vst [vmem:[#allocation2 + $0xc8] sm:$0xff] 0.0
          %293 = vst [vmem:[#allocation2 + $0xd0] sm:$0xff] 0.0
          %294 = vst [vmem:[#allocation2 + $0xd8] sm:$0xff] 0.0
          %295 = vst [vmem:[#allocation2 + $0xe0] sm:$0xff] 0.0
          %296 = vst [vmem:[#allocation2 + $0xe8] sm:$0xff] 0.0
          %297 = vst [vmem:[#allocation2 + $0xf0] sm:$0xff] 0.0
          %298 = vst [vmem:[#allocation2 + $0xf8] sm:$0xff] 0.0
        $region59: #{sgc_net_forward.2} parent=50 // pred_fallthru
          _
        %v299 = vld [vmem:[%s223] sm:$0xff]
        %v300 = vld [vmem:[%s223 + $0x8] sm:$0xff]
        %v301 = vld [vmem:[%s223 + $0x10] sm:$0xff]
        %v302 = vld [vmem:[%s223 + $0x18] sm:$0xff]
        %v303 = vld [vmem:[%s223 + $0x20] sm:$0xff]
        %v304 = vld [vmem:[%s223 + $0x28] sm:$0xff]
        %v305 = vld [vmem:[%s223 + $0x30] sm:$0xff]
        %v306 = vld [vmem:[%s223 + $0x38] sm:$0xff]
        %v307 = vld [vmem:[%s223 + $0x40] sm:$0xff]
        %v308 = vld [vmem:[%s223 + $0x48] sm:$0xff]
        %v309 = vld [vmem:[%s223 + $0x50] sm:$0xff]
        %v310 = vld [vmem:[%s223 + $0x58] sm:$0xff]
        %v311 = vld [vmem:[%s223 + $0x60] sm:$0xff]
        %v312 = vld [vmem:[%s223 + $0x68] sm:$0xff]
        %v313 = vld [vmem:[%s223 + $0x70] sm:$0xff]
        %v314 = vld [vmem:[%s223 + $0x78] sm:$0xff]
        %v315 = vunpack.c.0.s8 %v299
        %v316 = vunpack.c.0.s8 %v300
        %v317 = vunpack.c.1.s8 %v299
        %v318 = vunpack.c.1.s8 %v300
        %v319 = vunpack.c.2.s8 %v299
        %v320 = vunpack.c.2.s8 %v300
        %v321 = vunpack.c.3.s8 %v299
        %v322 = vunpack.c.3.s8 %v300
        %v323 = vunpack.c.0.s8 %v301
        %v324 = vunpack.c.0.s8 %v302
        %v325 = vunpack.c.1.s8 %v301
        %v326 = vunpack.c.1.s8 %v302
        %v327 = vunpack.c.2.s8 %v301
        %v328 = vunpack.c.2.s8 %v302
        %v329 = vunpack.c.3.s8 %v301
        %v330 = vunpack.c.3.s8 %v302
        %v331 = vunpack.c.0.s8 %v303
        %v332 = vunpack.c.0.s8 %v304
        %v333 = vunpack.c.1.s8 %v303
        %v334 = vunpack.c.1.s8 %v304
        %v335 = vunpack.c.2.s8 %v303
        %v336 = vunpack.c.2.s8 %v304
        %v337 = vunpack.c.3.s8 %v303
        %v338 = vunpack.c.3.s8 %v304
        %v339 = vunpack.c.0.s8 %v305
        %v340 = vunpack.c.0.s8 %v306
        %v341 = vunpack.c.1.s8 %v305
        %v342 = vunpack.c.1.s8 %v306
        %v343 = vunpack.c.2.s8 %v305
        %v344 = vunpack.c.2.s8 %v306
        %v345 = vunpack.c.3.s8 %v305
        %v346 = vunpack.c.3.s8 %v306
        %v347 = vunpack.c.0.s8 %v307
        %v348 = vunpack.c.0.s8 %v308
        %v349 = vunpack.c.1.s8 %v307
        %v350 = vunpack.c.1.s8 %v308
        %v351 = vunpack.c.2.s8 %v307
        %v352 = vunpack.c.2.s8 %v308
        %v353 = vunpack.c.3.s8 %v307
        %v354 = vunpack.c.3.s8 %v308
        %v355 = vunpack.c.0.s8 %v309
        %v356 = vunpack.c.0.s8 %v310
        %v357 = vunpack.c.1.s8 %v309
        %v358 = vunpack.c.1.s8 %v310
        %v359 = vunpack.c.2.s8 %v309
        %v360 = vunpack.c.2.s8 %v310
        %v361 = vunpack.c.3.s8 %v309
        %v362 = vunpack.c.3.s8 %v310
        %v363 = vunpack.c.0.s8 %v311
        %v364 = vunpack.c.0.s8 %v312
        %v365 = vunpack.c.1.s8 %v311
        %v366 = vunpack.c.1.s8 %v312
        %v367 = vunpack.c.2.s8 %v311
        %v368 = vunpack.c.2.s8 %v312
        %v369 = vunpack.c.3.s8 %v311
        %v370 = vunpack.c.3.s8 %v312
        %v371 = vunpack.c.0.s8 %v313
        %v372 = vunpack.c.0.s8 %v314
        %v373 = vunpack.c.1.s8 %v313
        %v374 = vunpack.c.1.s8 %v314
        %v375 = vunpack.c.2.s8 %v313
        %v376 = vunpack.c.2.s8 %v314
        %v377 = vunpack.c.3.s8 %v313
        %v378 = vunpack.c.3.s8 %v314
        %v379 = vcvt.s32.f32 %v315
        %v380 = vcvt.s32.f32 %v316
        %v381 = vcvt.s32.f32 %v317
        %v382 = vcvt.s32.f32 %v318
        %v383 = vcvt.s32.f32 %v319
        %v384 = vcvt.s32.f32 %v320
        %v385 = vcvt.s32.f32 %v321
        %v386 = vcvt.s32.f32 %v322
        %v387 = vcvt.s32.f32 %v323
        %v388 = vcvt.s32.f32 %v324
        %v389 = vcvt.s32.f32 %v325
        %v390 = vcvt.s32.f32 %v326
        %v391 = vcvt.s32.f32 %v327
        %v392 = vcvt.s32.f32 %v328
        %v393 = vcvt.s32.f32 %v329
        %v394 = vcvt.s32.f32 %v330
        %v395 = vcvt.s32.f32 %v331
        %v396 = vcvt.s32.f32 %v332
        %v397 = vcvt.s32.f32 %v333
        %v398 = vcvt.s32.f32 %v334
        %v399 = vcvt.s32.f32 %v335
        %v400 = vcvt.s32.f32 %v336
        %v401 = vcvt.s32.f32 %v337
        %v402 = vcvt.s32.f32 %v338
        %v403 = vcvt.s32.f32 %v339
        %v404 = vcvt.s32.f32 %v340
        %v405 = vcvt.s32.f32 %v341
        %v406 = vcvt.s32.f32 %v342
        %v407 = vcvt.s32.f32 %v343
        %v408 = vcvt.s32.f32 %v344
        %v409 = vcvt.s32.f32 %v345
        %v410 = vcvt.s32.f32 %v346
        %v411 = vcvt.s32.f32 %v347
        %v412 = vcvt.s32.f32 %v348
        %v413 = vcvt.s32.f32 %v349
        %v414 = vcvt.s32.f32 %v350
        %v415 = vcvt.s32.f32 %v351
        %v416 = vcvt.s32.f32 %v352
        %v417 = vcvt.s32.f32 %v353
        %v418 = vcvt.s32.f32 %v354
        %v419 = vcvt.s32.f32 %v355
        %v420 = vcvt.s32.f32 %v356
        %v421 = vcvt.s32.f32 %v357
        %v422 = vcvt.s32.f32 %v358
        %v423 = vcvt.s32.f32 %v359
        %v424 = vcvt.s32.f32 %v360
        %v425 = vcvt.s32.f32 %v361
        %v426 = vcvt.s32.f32 %v362
        %v427 = vcvt.s32.f32 %v363
        %v428 = vcvt.s32.f32 %v364
        %v429 = vcvt.s32.f32 %v365
        %v430 = vcvt.s32.f32 %v366
        %v431 = vcvt.s32.f32 %v367
        %v432 = vcvt.s32.f32 %v368
        %v433 = vcvt.s32.f32 %v369
        %v434 = vcvt.s32.f32 %v370
        %v435 = vcvt.s32.f32 %v371
        %v436 = vcvt.s32.f32 %v372
        %v437 = vcvt.s32.f32 %v373
        %v438 = vcvt.s32.f32 %v374
        %v439 = vcvt.s32.f32 %v375
        %v440 = vcvt.s32.f32 %v376
        %v441 = vcvt.s32.f32 %v377
        %v442 = vcvt.s32.f32 %v378
        %v443 = vpack.c.bf16 %v381, %v379
        %v444 = vpack.c.bf16 %v382, %v380
        %v445 = vpack.c.bf16 %v385, %v383
        %v446 = vpack.c.bf16 %v386, %v384
        %v447 = vpack.c.bf16 %v389, %v387
        %v448 = vpack.c.bf16 %v390, %v388
        %v449 = vpack.c.bf16 %v393, %v391
        %v450 = vpack.c.bf16 %v394, %v392
        %v451 = vpack.c.bf16 %v397, %v395
        %v452 = vpack.c.bf16 %v398, %v396
        %v453 = vpack.c.bf16 %v401, %v399
        %v454 = vpack.c.bf16 %v402, %v400
        %v455 = vpack.c.bf16 %v405, %v403
        %v456 = vpack.c.bf16 %v406, %v404
        %v457 = vpack.c.bf16 %v409, %v407
        %v458 = vpack.c.bf16 %v410, %v408
        %v459 = vpack.c.bf16 %v413, %v411
        %v460 = vpack.c.bf16 %v414, %v412
        %v461 = vpack.c.bf16 %v417, %v415
        %v462 = vpack.c.bf16 %v418, %v416
        %v463 = vpack.c.bf16 %v421, %v419
        %v464 = vpack.c.bf16 %v422, %v420
        %v465 = vpack.c.bf16 %v425, %v423
        %v466 = vpack.c.bf16 %v426, %v424
        %v467 = vpack.c.bf16 %v429, %v427
        %v468 = vpack.c.bf16 %v430, %v428
        %v469 = vpack.c.bf16 %v433, %v431
        %v470 = vpack.c.bf16 %v434, %v432
        %v471 = vpack.c.bf16 %v437, %v435
        %v472 = vpack.c.bf16 %v438, %v436
        %v473 = vpack.c.bf16 %v441, %v439
        %v474 = vpack.c.bf16 %v442, %v440
        %s475 = smul.u32 %s19, 256
        %s476 = sshra.s32 %s475, 3
        %s477 = sand.u32 %s475, 7
        %s478 = smul.addr %s476, 4
        %s479 = scalar_lea.vmem %s1, %s478
        %v480 = vld [vmem:[%s479] sm:$0xf]
        %v481 = vld [vmem:[%s479 + $0x4] sm:$0xf]
        %v482 = vld [vmem:[%s479 + $0x8] sm:$0xf]
        %v483 = vld [vmem:[%s479 + $0xc] sm:$0xf]
        %v484 = vld [vmem:[%s479 + $0x10] sm:$0xf]
        %v485 = vld [vmem:[%s479 + $0x14] sm:$0xf]
        %v486 = vld [vmem:[%s479 + $0x18] sm:$0xf]
        %v487 = vld [vmem:[%s479 + $0x1c] sm:$0xf]
        %v488 = vld [vmem:[%s479 + $0x20] sm:$0xf]
        %v489 = vld [vmem:[%s479 + $0x24] sm:$0xf]
        %v490 = vld [vmem:[%s479 + $0x28] sm:$0xf]
        %v491 = vld [vmem:[%s479 + $0x2c] sm:$0xf]
        %v492 = vld [vmem:[%s479 + $0x30] sm:$0xf]
        %v493 = vld [vmem:[%s479 + $0x34] sm:$0xf]
        %v494 = vld [vmem:[%s479 + $0x38] sm:$0xf]
        %v495 = vld [vmem:[%s479 + $0x3c] sm:$0xf]
        %v496 = vld [vmem:[%s479 + $0x40] sm:$0xf]
        %v497 = vld [vmem:[%s479 + $0x44] sm:$0xf]
        %v498 = vld [vmem:[%s479 + $0x48] sm:$0xf]
        %v499 = vld [vmem:[%s479 + $0x4c] sm:$0xf]
        %v500 = vld [vmem:[%s479 + $0x50] sm:$0xf]
        %v501 = vld [vmem:[%s479 + $0x54] sm:$0xf]
        %v502 = vld [vmem:[%s479 + $0x58] sm:$0xf]
        %v503 = vld [vmem:[%s479 + $0x5c] sm:$0xf]
        %v504 = vld [vmem:[%s479 + $0x60] sm:$0xf]
        %v505 = vld [vmem:[%s479 + $0x64] sm:$0xf]
        %v506 = vld [vmem:[%s479 + $0x68] sm:$0xf]
        %v507 = vld [vmem:[%s479 + $0x6c] sm:$0xf]
        %v508 = vld [vmem:[%s479 + $0x70] sm:$0xf]
        %v509 = vld [vmem:[%s479 + $0x74] sm:$0xf]
        %v510 = vld [vmem:[%s479 + $0x78] sm:$0xf]
        %v511 = vld [vmem:[%s479 + $0x7c] sm:$0xf]
        %v512 = vld [vmem:[#allocation2] sm:$0xff]
        %v513 = vld [vmem:[#allocation2 + $0x8] sm:$0xff]
        %v514 = vld [vmem:[#allocation2 + $0x10] sm:$0xff]
        %v515 = vld [vmem:[#allocation2 + $0x18] sm:$0xff]
        %v516 = vld [vmem:[#allocation2 + $0x20] sm:$0xff]
        %v517 = vld [vmem:[#allocation2 + $0x28] sm:$0xff]
        %v518 = vld [vmem:[#allocation2 + $0x30] sm:$0xff]
        %v519 = vld [vmem:[#allocation2 + $0x38] sm:$0xff]
        %v520 = vld [vmem:[#allocation2 + $0x40] sm:$0xff]
        %v521 = vld [vmem:[#allocation2 + $0x48] sm:$0xff]
        %v522 = vld [vmem:[#allocation2 + $0x50] sm:$0xff]
        %v523 = vld [vmem:[#allocation2 + $0x58] sm:$0xff]
        %v524 = vld [vmem:[#allocation2 + $0x60] sm:$0xff]
        %v525 = vld [vmem:[#allocation2 + $0x68] sm:$0xff]
        %v526 = vld [vmem:[#allocation2 + $0x70] sm:$0xff]
        %v527 = vld [vmem:[#allocation2 + $0x78] sm:$0xff]
        %v528 = vld [vmem:[#allocation2 + $0x80] sm:$0xff]
        %v529 = vld [vmem:[#allocation2 + $0x88] sm:$0xff]
        %v530 = vld [vmem:[#allocation2 + $0x90] sm:$0xff]
        %v531 = vld [vmem:[#allocation2 + $0x98] sm:$0xff]
        %v532 = vld [vmem:[#allocation2 + $0xa0] sm:$0xff]
        %v533 = vld [vmem:[#allocation2 + $0xa8] sm:$0xff]
        %v534 = vld [vmem:[#allocation2 + $0xb0] sm:$0xff]
        %v535 = vld [vmem:[#allocation2 + $0xb8] sm:$0xff]
        %v536 = vld [vmem:[#allocation2 + $0xc0] sm:$0xff]
        %v537 = vld [vmem:[#allocation2 + $0xc8] sm:$0xff]
        %v538 = vld [vmem:[#allocation2 + $0xd0] sm:$0xff]
        %v539 = vld [vmem:[#allocation2 + $0xd8] sm:$0xff]
        %v540 = vld [vmem:[#allocation2 + $0xe0] sm:$0xff]
        %v541 = vld [vmem:[#allocation2 + $0xe8] sm:$0xff]
        %v542 = vld [vmem:[#allocation2 + $0xf0] sm:$0xff]
        %v543 = vld [vmem:[#allocation2 + $0xf8] sm:$0xff]
        %v576 = vunpack.c.l.b16 %v480
        %v577 = vunpack.c.l.b16 %v481
        %v578 = vunpack.c.l.b16 %v482
        %v579 = vunpack.c.l.b16 %v483
        %v580 = vunpack.c.l.b16 %v484
        %v581 = vunpack.c.l.b16 %v485
        %v582 = vunpack.c.l.b16 %v486
        %v583 = vunpack.c.l.b16 %v487
        %v584 = vunpack.c.l.b16 %v488
        %v585 = vunpack.c.l.b16 %v489
        %v586 = vunpack.c.l.b16 %v490
        %v587 = vunpack.c.l.b16 %v491
        %v588 = vunpack.c.l.b16 %v492
        %v589 = vunpack.c.l.b16 %v493
        %v590 = vunpack.c.l.b16 %v494
        %v591 = vunpack.c.l.b16 %v495
        %v592 = vunpack.c.l.b16 %v496
        %v593 = vunpack.c.l.b16 %v497
        %v594 = vunpack.c.l.b16 %v498
        %v595 = vunpack.c.l.b16 %v499
        %v596 = vunpack.c.l.b16 %v500
        %v597 = vunpack.c.l.b16 %v501
        %v598 = vunpack.c.l.b16 %v502
        %v599 = vunpack.c.l.b16 %v503
        %v600 = vunpack.c.l.b16 %v504
        %v601 = vunpack.c.l.b16 %v505
        %v602 = vunpack.c.l.b16 %v506
        %v603 = vunpack.c.l.b16 %v507
        %v604 = vunpack.c.l.b16 %v508
        %v605 = vunpack.c.l.b16 %v509
        %v606 = vunpack.c.l.b16 %v510
        %v607 = vunpack.c.l.b16 %v511
        %v608 = vpack.c.b16 %v577, %v576
        %v609 = vpack.c.b16 %v579, %v578
        %v610 = vpack.c.b16 %v581, %v580
        %v611 = vpack.c.b16 %v583, %v582
        %v612 = vpack.c.b16 %v585, %v584
        %v613 = vpack.c.b16 %v587, %v586
        %v614 = vpack.c.b16 %v589, %v588
        %v615 = vpack.c.b16 %v591, %v590
        %v616 = vpack.c.b16 %v593, %v592
        %v617 = vpack.c.b16 %v595, %v594
        %v618 = vpack.c.b16 %v597, %v596
        %v619 = vpack.c.b16 %v599, %v598
        %v620 = vpack.c.b16 %v601, %v600
        %v621 = vpack.c.b16 %v603, %v602
        %v622 = vpack.c.b16 %v605, %v604
        %v623 = vpack.c.b16 %v607, %v606
        %640 = vmatpush.bf16.msra.mxu0 %v615
        %641 = vmatpush.bf16.msra.mxu0 %v614
        %642 = vmatpush.bf16.msra.mxu0 %v613
        %643 = vmatpush.bf16.msra.mxu0 %v612
        %644 = vmatpush.bf16.msra.mxu0 %v611
        %645 = vmatpush.bf16.msra.mxu0 %v610
        %646 = vmatpush.bf16.msra.mxu0 %v609
        %647 = vmatpush.bf16.msra.mxu0 %v608
        %648 = vmatmul.bf16.gmra.mxu0 %v443
        %v649 = vpop.f32.mrf.mxu0
        %v650 = vadd.f32 0.0, %v649
        %v651 = vpop.f32.mrf.mxu0
        %v652 = vadd.f32 0.0, %v651
        %653 = vmatmul.bf16.gmra.mxu0 %v445
        %v654 = vpop.f32.mrf.mxu0
        %v655 = vadd.f32 0.0, %v654
        %v656 = vpop.f32.mrf.mxu0
        %v657 = vadd.f32 0.0, %v656
        %658 = vmatmul.bf16.gmra.mxu0 %v447
        %v659 = vpop.f32.mrf.mxu0
        %v660 = vadd.f32 0.0, %v659
        %v661 = vpop.f32.mrf.mxu0
        %v662 = vadd.f32 0.0, %v661
        %663 = vmatmul.bf16.gmra.mxu0 %v449
        %v664 = vpop.f32.mrf.mxu0
        %v665 = vadd.f32 0.0, %v664
        %v666 = vpop.f32.mrf.mxu0
        %v667 = vadd.f32 0.0, %v666
        %668 = vmatmul.bf16.gmra.mxu0 %v451
        %v669 = vpop.f32.mrf.mxu0
        %v670 = vadd.f32 0.0, %v669
        %v671 = vpop.f32.mrf.mxu0
        %v672 = vadd.f32 0.0, %v671
        %673 = vmatmul.bf16.gmra.mxu0 %v453
        %v674 = vpop.f32.mrf.mxu0
        %v675 = vadd.f32 0.0, %v674
        %v676 = vpop.f32.mrf.mxu0
        %v677 = vadd.f32 0.0, %v676
        %678 = vmatmul.bf16.gmra.mxu0 %v455
        %v679 = vpop.f32.mrf.mxu0
        %v680 = vadd.f32 0.0, %v679
        %v681 = vpop.f32.mrf.mxu0
        %v682 = vadd.f32 0.0, %v681
        %683 = vmatmul.bf16.gmra.mxu0 %v457
        %v684 = vpop.f32.mrf.mxu0
        %v685 = vadd.f32 0.0, %v684
        %v686 = vpop.f32.mrf.mxu0
        %v687 = vadd.f32 0.0, %v686
        %688 = vmatmul.bf16.gmra.mxu0 %v459
        %v689 = vpop.f32.mrf.mxu0
        %v690 = vadd.f32 0.0, %v689
        %v691 = vpop.f32.mrf.mxu0
        %v692 = vadd.f32 0.0, %v691
        %693 = vmatmul.bf16.gmra.mxu0 %v461
        %v694 = vpop.f32.mrf.mxu0
        %v695 = vadd.f32 0.0, %v694
        %v696 = vpop.f32.mrf.mxu0
        %v697 = vadd.f32 0.0, %v696
        %698 = vmatmul.bf16.gmra.mxu0 %v463
        %v699 = vpop.f32.mrf.mxu0
        %v700 = vadd.f32 0.0, %v699
        %v701 = vpop.f32.mrf.mxu0
        %v702 = vadd.f32 0.0, %v701
        %703 = vmatmul.bf16.gmra.mxu0 %v465
        %v704 = vpop.f32.mrf.mxu0
        %v705 = vadd.f32 0.0, %v704
        %v706 = vpop.f32.mrf.mxu0
        %v707 = vadd.f32 0.0, %v706
        %708 = vmatmul.bf16.gmra.mxu0 %v467
        %v709 = vpop.f32.mrf.mxu0
        %v710 = vadd.f32 0.0, %v709
        %v711 = vpop.f32.mrf.mxu0
        %v712 = vadd.f32 0.0, %v711
        %713 = vmatmul.bf16.gmra.mxu0 %v469
        %v714 = vpop.f32.mrf.mxu0
        %v715 = vadd.f32 0.0, %v714
        %v716 = vpop.f32.mrf.mxu0
        %v717 = vadd.f32 0.0, %v716
        %718 = vmatmul.bf16.gmra.mxu0 %v471
        %v719 = vpop.f32.mrf.mxu0
        %v720 = vadd.f32 0.0, %v719
        %v721 = vpop.f32.mrf.mxu0
        %v722 = vadd.f32 0.0, %v721
        %723 = vmatmul.bf16.gmra.mxu0 %v473
        %v724 = vpop.f32.mrf.mxu0
        %v725 = vadd.f32 0.0, %v724
        %v726 = vpop.f32.mrf.mxu0
        %v727 = vadd.f32 0.0, %v726
        %728 = vdwg.mxu0
        %729 = vmatpush.bf16.msra.mxu0 %v623
        %730 = vmatpush.bf16.msra.mxu0 %v622
        %731 = vmatpush.bf16.msra.mxu0 %v621
        %732 = vmatpush.bf16.msra.mxu0 %v620
        %733 = vmatpush.bf16.msra.mxu0 %v619
        %734 = vmatpush.bf16.msra.mxu0 %v618
        %735 = vmatpush.bf16.msra.mxu0 %v617
        %736 = vmatpush.bf16.msra.mxu0 %v616
        %737 = vmatmul.bf16.gmra.mxu0 %v444
        %v738 = vpop.f32.mrf.mxu0
        %v739 = vadd.f32 %v650, %v738
        %v740 = vpop.f32.mrf.mxu0
        %v741 = vadd.f32 %v652, %v740
        %742 = vmatmul.bf16.gmra.mxu0 %v446
        %v743 = vpop.f32.mrf.mxu0
        %v744 = vadd.f32 %v655, %v743
        %v745 = vpop.f32.mrf.mxu0
        %v746 = vadd.f32 %v657, %v745
        %747 = vmatmul.bf16.gmra.mxu0 %v448
        %v748 = vpop.f32.mrf.mxu0
        %v749 = vadd.f32 %v660, %v748
        %v750 = vpop.f32.mrf.mxu0
        %v751 = vadd.f32 %v662, %v750
        %752 = vmatmul.bf16.gmra.mxu0 %v450
        %v753 = vpop.f32.mrf.mxu0
        %v754 = vadd.f32 %v665, %v753
        %v755 = vpop.f32.mrf.mxu0
        %v756 = vadd.f32 %v667, %v755
        %757 = vmatmul.bf16.gmra.mxu0 %v452
        %v758 = vpop.f32.mrf.mxu0
        %v759 = vadd.f32 %v670, %v758
        %v760 = vpop.f32.mrf.mxu0
        %v761 = vadd.f32 %v672, %v760
        %762 = vmatmul.bf16.gmra.mxu0 %v454
        %v763 = vpop.f32.mrf.mxu0
        %v764 = vadd.f32 %v675, %v763
        %v765 = vpop.f32.mrf.mxu0
        %v766 = vadd.f32 %v677, %v765
        %767 = vmatmul.bf16.gmra.mxu0 %v456
        %v768 = vpop.f32.mrf.mxu0
        %v769 = vadd.f32 %v680, %v768
        %v770 = vpop.f32.mrf.mxu0
        %v771 = vadd.f32 %v682, %v770
        %772 = vmatmul.bf16.gmra.mxu0 %v458
        %v773 = vpop.f32.mrf.mxu0
        %v774 = vadd.f32 %v685, %v773
        %v775 = vpop.f32.mrf.mxu0
        %v776 = vadd.f32 %v687, %v775
        %777 = vmatmul.bf16.gmra.mxu0 %v460
        %v778 = vpop.f32.mrf.mxu0
        %v779 = vadd.f32 %v690, %v778
        %v780 = vpop.f32.mrf.mxu0
        %v781 = vadd.f32 %v692, %v780
        %782 = vmatmul.bf16.gmra.mxu0 %v462
        %v783 = vpop.f32.mrf.mxu0
        %v784 = vadd.f32 %v695, %v783
        %v785 = vpop.f32.mrf.mxu0
        %v786 = vadd.f32 %v697, %v785
        %787 = vmatmul.bf16.gmra.mxu0 %v464
        %v788 = vpop.f32.mrf.mxu0
        %v789 = vadd.f32 %v700, %v788
        %v790 = vpop.f32.mrf.mxu0
        %v791 = vadd.f32 %v702, %v790
        %792 = vmatmul.bf16.gmra.mxu0 %v466
        %v793 = vpop.f32.mrf.mxu0
        %v794 = vadd.f32 %v705, %v793
        %v795 = vpop.f32.mrf.mxu0
        %v796 = vadd.f32 %v707, %v795
        %797 = vmatmul.bf16.gmra.mxu0 %v468
        %v798 = vpop.f32.mrf.mxu0
        %v799 = vadd.f32 %v710, %v798
        %v800 = vpop.f32.mrf.mxu0
        %v801 = vadd.f32 %v712, %v800
        %802 = vmatmul.bf16.gmra.mxu0 %v470
        %v803 = vpop.f32.mrf.mxu0
        %v804 = vadd.f32 %v715, %v803
        %v805 = vpop.f32.mrf.mxu0
        %v806 = vadd.f32 %v717, %v805
        %807 = vmatmul.bf16.gmra.mxu0 %v472
        %v808 = vpop.f32.mrf.mxu0
        %v809 = vadd.f32 %v720, %v808
        %v810 = vpop.f32.mrf.mxu0
        %v811 = vadd.f32 %v722, %v810
        %812 = vmatmul.bf16.gmra.mxu0 %v474
        %v813 = vpop.f32.mrf.mxu0
        %v814 = vadd.f32 %v725, %v813
        %v815 = vpop.f32.mrf.mxu0
        %v816 = vadd.f32 %v727, %v815
        %817 = vdwg.mxu0
        %v818 = vadd.f32 %v512, %v739
        %v819 = vadd.f32 %v513, %v741
        %v820 = vadd.f32 %v514, %v744
        %v821 = vadd.f32 %v515, %v746
        %v822 = vadd.f32 %v516, %v749
        %v823 = vadd.f32 %v517, %v751
        %v824 = vadd.f32 %v518, %v754
        %v825 = vadd.f32 %v519, %v756
        %v826 = vadd.f32 %v520, %v759
        %v827 = vadd.f32 %v521, %v761
        %v828 = vadd.f32 %v522, %v764
        %v829 = vadd.f32 %v523, %v766
        %v830 = vadd.f32 %v524, %v769
        %v831 = vadd.f32 %v525, %v771
        %v832 = vadd.f32 %v526, %v774
        %v833 = vadd.f32 %v527, %v776
        %v834 = vadd.f32 %v528, %v779
        %v835 = vadd.f32 %v529, %v781
        %v836 = vadd.f32 %v530, %v784
        %v837 = vadd.f32 %v531, %v786
        %v838 = vadd.f32 %v532, %v789
        %v839 = vadd.f32 %v533, %v791
        %v840 = vadd.f32 %v534, %v794
        %v841 = vadd.f32 %v535, %v796
        %v842 = vadd.f32 %v536, %v799
        %v843 = vadd.f32 %v537, %v801
        %v844 = vadd.f32 %v538, %v804
        %v845 = vadd.f32 %v539, %v806
        %v846 = vadd.f32 %v540, %v809
        %v847 = vadd.f32 %v541, %v811
        %v848 = vadd.f32 %v542, %v814
        %v849 = vadd.f32 %v543, %v816
        %850 = vst [vmem:[#allocation2] sm:$0xff] %v818
        %851 = vst [vmem:[#allocation2 + $0x8] sm:$0xff] %v819
        %852 = vst [vmem:[#allocation2 + $0x10] sm:$0xff] %v820
        %853 = vst [vmem:[#allocation2 + $0x18] sm:$0xff] %v821
        %854 = vst [vmem:[#allocation2 + $0x20] sm:$0xff] %v822
        %855 = vst [vmem:[#allocation2 + $0x28] sm:$0xff] %v823
        %856 = vst [vmem:[#allocation2 + $0x30] sm:$0xff] %v824
        %857 = vst [vmem:[#allocation2 + $0x38] sm:$0xff] %v825
        %858 = vst [vmem:[#allocation2 + $0x40] sm:$0xff] %v826
        %859 = vst [vmem:[#allocation2 + $0x48] sm:$0xff] %v827
        %860 = vst [vmem:[#allocation2 + $0x50] sm:$0xff] %v828
        %861 = vst [vmem:[#allocation2 + $0x58] sm:$0xff] %v829
        %862 = vst [vmem:[#allocation2 + $0x60] sm:$0xff] %v830
        %863 = vst [vmem:[#allocation2 + $0x68] sm:$0xff] %v831
        %864 = vst [vmem:[#allocation2 + $0x70] sm:$0xff] %v832
        %865 = vst [vmem:[#allocation2 + $0x78] sm:$0xff] %v833
        %866 = vst [vmem:[#allocation2 + $0x80] sm:$0xff] %v834
        %867 = vst [vmem:[#allocation2 + $0x88] sm:$0xff] %v835
        %868 = vst [vmem:[#allocation2 + $0x90] sm:$0xff] %v836
        %869 = vst [vmem:[#allocation2 + $0x98] sm:$0xff] %v837
        %870 = vst [vmem:[#allocation2 + $0xa0] sm:$0xff] %v838
        %871 = vst [vmem:[#allocation2 + $0xa8] sm:$0xff] %v839
        %872 = vst [vmem:[#allocation2 + $0xb0] sm:$0xff] %v840
        %873 = vst [vmem:[#allocation2 + $0xb8] sm:$0xff] %v841
        %874 = vst [vmem:[#allocation2 + $0xc0] sm:$0xff] %v842
        %875 = vst [vmem:[#allocation2 + $0xc8] sm:$0xff] %v843
        %876 = vst [vmem:[#allocation2 + $0xd0] sm:$0xff] %v844
        %877 = vst [vmem:[#allocation2 + $0xd8] sm:$0xff] %v845
        %878 = vst [vmem:[#allocation2 + $0xe0] sm:$0xff] %v846
        %879 = vst [vmem:[#allocation2 + $0xe8] sm:$0xff] %v847
        %880 = vst [vmem:[#allocation2 + $0xf0] sm:$0xff] %v848
        %881 = vst [vmem:[#allocation2 + $0xf8] sm:$0xff] %v849
        %p882 = scmp.eq.s32.totalorder %s19, 1
        // Predicated region
        $region60: #{sgc_net_forward.2} parent=50 // pred_check
          %p883 = pneg %p882
        $region61: #{sgc_net_forward.2} parent=50 // pred_check_branch
          %885 = sbr.rel (%p883) target = $region63
        $region62: #{sgc_net_forward.2} parent=50 // pred_region
          %v886 = vld [vmem:[#allocation2] sm:$0xff]
          %v887 = vld [vmem:[#allocation2 + $0x8] sm:$0xff]
          %v888 = vld [vmem:[#allocation2 + $0x10] sm:$0xff]
          %v889 = vld [vmem:[#allocation2 + $0x18] sm:$0xff]
          %v890 = vld [vmem:[#allocation2 + $0x20] sm:$0xff]
          %v891 = vld [vmem:[#allocation2 + $0x28] sm:$0xff]
          %v892 = vld [vmem:[#allocation2 + $0x30] sm:$0xff]
          %v893 = vld [vmem:[#allocation2 + $0x38] sm:$0xff]
          %v894 = vld [vmem:[#allocation2 + $0x40] sm:$0xff]
          %v895 = vld [vmem:[#allocation2 + $0x48] sm:$0xff]
          %v896 = vld [vmem:[#allocation2 + $0x50] sm:$0xff]
          %v897 = vld [vmem:[#allocation2 + $0x58] sm:$0xff]
          %v898 = vld [vmem:[#allocation2 + $0x60] sm:$0xff]
          %v899 = vld [vmem:[#allocation2 + $0x68] sm:$0xff]
          %v900 = vld [vmem:[#allocation2 + $0x70] sm:$0xff]
          %v901 = vld [vmem:[#allocation2 + $0x78] sm:$0xff]
          %v902 = vld [vmem:[#allocation2 + $0x80] sm:$0xff]
          %v903 = vld [vmem:[#allocation2 + $0x88] sm:$0xff]
          %v904 = vld [vmem:[#allocation2 + $0x90] sm:$0xff]
          %v905 = vld [vmem:[#allocation2 + $0x98] sm:$0xff]
          %v906 = vld [vmem:[#allocation2 + $0xa0] sm:$0xff]
          %v907 = vld [vmem:[#allocation2 + $0xa8] sm:$0xff]
          %v908 = vld [vmem:[#allocation2 + $0xb0] sm:$0xff]
          %v909 = vld [vmem:[#allocation2 + $0xb8] sm:$0xff]
          %v910 = vld [vmem:[#allocation2 + $0xc0] sm:$0xff]
          %v911 = vld [vmem:[#allocation2 + $0xc8] sm:$0xff]
          %v912 = vld [vmem:[#allocation2 + $0xd0] sm:$0xff]
          %v913 = vld [vmem:[#allocation2 + $0xd8] sm:$0xff]
          %v914 = vld [vmem:[#allocation2 + $0xe0] sm:$0xff]
          %v915 = vld [vmem:[#allocation2 + $0xe8] sm:$0xff]
          %v916 = vld [vmem:[#allocation2 + $0xf0] sm:$0xff]
          %v917 = vld [vmem:[#allocation2 + $0xf8] sm:$0xff]
          %v918 = vld [vmem:[%s255] sm:$0xff]
          %v919 = vld [vmem:[%s255 + $0x8] sm:$0xff]
          %v920 = vld [vmem:[%s255 + $0x10] sm:$0xff]
          %v921 = vld [vmem:[%s255 + $0x18] sm:$0xff]
          %v922 = vld [vmem:[%s255 + $0x20] sm:$0xff]
          %v923 = vld [vmem:[%s255 + $0x28] sm:$0xff]
          %v924 = vld [vmem:[%s255 + $0x30] sm:$0xff]
          %v925 = vld [vmem:[%s255 + $0x38] sm:$0xff]
          %v926 = vld [vmem:[%s255 + $0x40] sm:$0xff]
          %v927 = vld [vmem:[%s255 + $0x48] sm:$0xff]
          %v928 = vld [vmem:[%s255 + $0x50] sm:$0xff]
          %v929 = vld [vmem:[%s255 + $0x58] sm:$0xff]
          %v930 = vld [vmem:[%s255 + $0x60] sm:$0xff]
          %v931 = vld [vmem:[%s255 + $0x68] sm:$0xff]
          %v932 = vld [vmem:[%s255 + $0x70] sm:$0xff]
          %v933 = vld [vmem:[%s255 + $0x78] sm:$0xff]
          %v934 = vld [vmem:[%s255 + $0x80] sm:$0xff]
          %v935 = vld [vmem:[%s255 + $0x88] sm:$0xff]
          %v936 = vld [vmem:[%s255 + $0x90] sm:$0xff]
          %v937 = vld [vmem:[%s255 + $0x98] sm:$0xff]
          %v938 = vld [vmem:[%s255 + $0xa0] sm:$0xff]
          %v939 = vld [vmem:[%s255 + $0xa8] sm:$0xff]
          %v940 = vld [vmem:[%s255 + $0xb0] sm:$0xff]
          %v941 = vld [vmem:[%s255 + $0xb8] sm:$0xff]
          %v942 = vld [vmem:[%s255 + $0xc0] sm:$0xff]
          %v943 = vld [vmem:[%s255 + $0xc8] sm:$0xff]
          %v944 = vld [vmem:[%s255 + $0xd0] sm:$0xff]
          %v945 = vld [vmem:[%s255 + $0xd8] sm:$0xff]
          %v946 = vld [vmem:[%s255 + $0xe0] sm:$0xff]
          %v947 = vld [vmem:[%s255 + $0xe8] sm:$0xff]
          %v948 = vld [vmem:[%s255 + $0xf0] sm:$0xff]
          %v949 = vld [vmem:[%s255 + $0xf8] sm:$0xff]
          %951 = vset.pattern.permute.xlu0 0
          %952 = vperm.xlu0 %951, %v918
          %v953 = vpop.permute.xlu0 %952
          %956 = vset.pattern.permute.xlu0 0
          %957 = vperm.xlu0 %956, %v919
          %v958 = vpop.permute.xlu0 %957
          %961 = vset.pattern.permute.xlu0 0
          %962 = vperm.xlu0 %961, %v920
          %v963 = vpop.permute.xlu0 %962
          %966 = vset.pattern.permute.xlu0 0
          %967 = vperm.xlu0 %966, %v921
          %v968 = vpop.permute.xlu0 %967
          %971 = vset.pattern.permute.xlu0 0
          %972 = vperm.xlu0 %971, %v922
          %v973 = vpop.permute.xlu0 %972
          %976 = vset.pattern.permute.xlu0 0
          %977 = vperm.xlu0 %976, %v923
          %v978 = vpop.permute.xlu0 %977
          %981 = vset.pattern.permute.xlu0 0
          %982 = vperm.xlu0 %981, %v924
          %v983 = vpop.permute.xlu0 %982
          %986 = vset.pattern.permute.xlu0 0
          %987 = vperm.xlu0 %986, %v925
          %v988 = vpop.permute.xlu0 %987
          %991 = vset.pattern.permute.xlu0 0
          %992 = vperm.xlu0 %991, %v926
          %v993 = vpop.permute.xlu0 %992
          %996 = vset.pattern.permute.xlu0 0
          %997 = vperm.xlu0 %996, %v927
          %v998 = vpop.permute.xlu0 %997
          %1001 = vset.pattern.permute.xlu0 0
          %1002 = vperm.xlu0 %1001, %v928
          %v1003 = vpop.permute.xlu0 %1002
          %1006 = vset.pattern.permute.xlu0 0
          %1007 = vperm.xlu0 %1006, %v929
          %v1008 = vpop.permute.xlu0 %1007
          %1011 = vset.pattern.permute.xlu0 0
          %1012 = vperm.xlu0 %1011, %v930
          %v1013 = vpop.permute.xlu0 %1012
          %1016 = vset.pattern.permute.xlu0 0
          %1017 = vperm.xlu0 %1016, %v931
          %v1018 = vpop.permute.xlu0 %1017
          %1021 = vset.pattern.permute.xlu0 0
          %1022 = vperm.xlu0 %1021, %v932
          %v1023 = vpop.permute.xlu0 %1022
          %1026 = vset.pattern.permute.xlu0 0
          %1027 = vperm.xlu0 %1026, %v933
          %v1028 = vpop.permute.xlu0 %1027
          %1031 = vset.pattern.permute.xlu0 0
          %1032 = vperm.xlu0 %1031, %v934
          %v1033 = vpop.permute.xlu0 %1032
          %1036 = vset.pattern.permute.xlu0 0
          %1037 = vperm.xlu0 %1036, %v935
          %v1038 = vpop.permute.xlu0 %1037
          %1041 = vset.pattern.permute.xlu0 0
          %1042 = vperm.xlu0 %1041, %v936
          %v1043 = vpop.permute.xlu0 %1042
          %1046 = vset.pattern.permute.xlu0 0
          %1047 = vperm.xlu0 %1046, %v937
          %v1048 = vpop.permute.xlu0 %1047
          %1051 = vset.pattern.permute.xlu0 0
          %1052 = vperm.xlu0 %1051, %v938
          %v1053 = vpop.permute.xlu0 %1052
          %1056 = vset.pattern.permute.xlu0 0
          %1057 = vperm.xlu0 %1056, %v939
          %v1058 = vpop.permute.xlu0 %1057
          %1061 = vset.pattern.permute.xlu0 0
          %1062 = vperm.xlu0 %1061, %v940
          %v1063 = vpop.permute.xlu0 %1062
          %1066 = vset.pattern.permute.xlu0 0
          %1067 = vperm.xlu0 %1066, %v941
          %v1068 = vpop.permute.xlu0 %1067
          %1071 = vset.pattern.permute.xlu0 0
          %1072 = vperm.xlu0 %1071, %v942
          %v1073 = vpop.permute.xlu0 %1072
          %1076 = vset.pattern.permute.xlu0 0
          %1077 = vperm.xlu0 %1076, %v943
          %v1078 = vpop.permute.xlu0 %1077
          %1081 = vset.pattern.permute.xlu0 0
          %1082 = vperm.xlu0 %1081, %v944
          %v1083 = vpop.permute.xlu0 %1082
          %1086 = vset.pattern.permute.xlu0 0
          %1087 = vperm.xlu0 %1086, %v945
          %v1088 = vpop.permute.xlu0 %1087
          %1091 = vset.pattern.permute.xlu0 0
          %1092 = vperm.xlu0 %1091, %v946
          %v1093 = vpop.permute.xlu0 %1092
          %1096 = vset.pattern.permute.xlu0 0
          %1097 = vperm.xlu0 %1096, %v947
          %v1098 = vpop.permute.xlu0 %1097
          %1101 = vset.pattern.permute.xlu0 0
          %1102 = vperm.xlu0 %1101, %v948
          %v1103 = vpop.permute.xlu0 %1102
          %1106 = vset.pattern.permute.xlu0 0
          %1107 = vperm.xlu0 %1106, %v949
          %v1108 = vpop.permute.xlu0 %1107
          %v1110 = vmul.f32 %v886, %v953
          %v1111 = vmul.f32 %v887, %v958
          %v1112 = vmul.f32 %v888, %v963
          %v1113 = vmul.f32 %v889, %v968
          %v1114 = vmul.f32 %v890, %v973
          %v1115 = vmul.f32 %v891, %v978
          %v1116 = vmul.f32 %v892, %v983
          %v1117 = vmul.f32 %v893, %v988
          %v1118 = vmul.f32 %v894, %v993
          %v1119 = vmul.f32 %v895, %v998
          %v1120 = vmul.f32 %v896, %v1003
          %v1121 = vmul.f32 %v897, %v1008
          %v1122 = vmul.f32 %v898, %v1013
          %v1123 = vmul.f32 %v899, %v1018
          %v1124 = vmul.f32 %v900, %v1023
          %v1125 = vmul.f32 %v901, %v1028
          %v1126 = vmul.f32 %v902, %v1033
          %v1127 = vmul.f32 %v903, %v1038
          %v1128 = vmul.f32 %v904, %v1043
          %v1129 = vmul.f32 %v905, %v1048
          %v1130 = vmul.f32 %v906, %v1053
          %v1131 = vmul.f32 %v907, %v1058
          %v1132 = vmul.f32 %v908, %v1063
          %v1133 = vmul.f32 %v909, %v1068
          %v1134 = vmul.f32 %v910, %v1073
          %v1135 = vmul.f32 %v911, %v1078
          %v1136 = vmul.f32 %v912, %v1083
          %v1137 = vmul.f32 %v913, %v1088
          %v1138 = vmul.f32 %v914, %v1093
          %v1139 = vmul.f32 %v915, %v1098
          %v1140 = vmul.f32 %v916, %v1103
          %v1141 = vmul.f32 %v917, %v1108
          %v1142 = vpack.c.bf16 %v1110, %v1110
          %v1143 = vpack.c.bf16 %v1111, %v1111
          %v1144 = vpack.c.bf16 %v1112, %v1112
          %v1145 = vpack.c.bf16 %v1113, %v1113
          %v1146 = vpack.c.bf16 %v1114, %v1114
          %v1147 = vpack.c.bf16 %v1115, %v1115
          %v1148 = vpack.c.bf16 %v1116, %v1116
          %v1149 = vpack.c.bf16 %v1117, %v1117
          %v1150 = vpack.c.bf16 %v1118, %v1118
          %v1151 = vpack.c.bf16 %v1119, %v1119
          %v1152 = vpack.c.bf16 %v1120, %v1120
          %v1153 = vpack.c.bf16 %v1121, %v1121
          %v1154 = vpack.c.bf16 %v1122, %v1122
          %v1155 = vpack.c.bf16 %v1123, %v1123
          %v1156 = vpack.c.bf16 %v1124, %v1124
          %v1157 = vpack.c.bf16 %v1125, %v1125
          %v1158 = vpack.c.bf16 %v1126, %v1126
          %v1159 = vpack.c.bf16 %v1127, %v1127
          %v1160 = vpack.c.bf16 %v1128, %v1128
          %v1161 = vpack.c.bf16 %v1129, %v1129
          %v1162 = vpack.c.bf16 %v1130, %v1130
          %v1163 = vpack.c.bf16 %v1131, %v1131
          %v1164 = vpack.c.bf16 %v1132, %v1132
          %v1165 = vpack.c.bf16 %v1133, %v1133
          %v1166 = vpack.c.bf16 %v1134, %v1134
          %v1167 = vpack.c.bf16 %v1135, %v1135
          %v1168 = vpack.c.bf16 %v1136, %v1136
          %v1169 = vpack.c.bf16 %v1137, %v1137
          %v1170 = vpack.c.bf16 %v1138, %v1138
          %v1171 = vpack.c.bf16 %v1139, %v1139
          %v1172 = vpack.c.bf16 %v1140, %v1140
          %v1173 = vpack.c.bf16 %v1141, %v1141
          %1174 = vst [vmem:[%s261] sm:$0xf] %v1142
          %1175 = vst [vmem:[%s261 + $0x4] sm:$0xf] %v1143
          %1176 = vst [vmem:[%s261 + $0x8] sm:$0xf] %v1144
          %1177 = vst [vmem:[%s261 + $0xc] sm:$0xf] %v1145
          %1178 = vst [vmem:[%s261 + $0x10] sm:$0xf] %v1146
          %1179 = vst [vmem:[%s261 + $0x14] sm:$0xf] %v1147
          %1180 = vst [vmem:[%s261 + $0x18] sm:$0xf] %v1148
          %1181 = vst [vmem:[%s261 + $0x1c] sm:$0xf] %v1149
          %1182 = vst [vmem:[%s261 + $0x20] sm:$0xf] %v1150
          %1183 = vst [vmem:[%s261 + $0x24] sm:$0xf] %v1151
          %1184 = vst [vmem:[%s261 + $0x28] sm:$0xf] %v1152
          %1185 = vst [vmem:[%s261 + $0x2c] sm:$0xf] %v1153
          %1186 = vst [vmem:[%s261 + $0x30] sm:$0xf] %v1154
          %1187 = vst [vmem:[%s261 + $0x34] sm:$0xf] %v1155
          %1188 = vst [vmem:[%s261 + $0x38] sm:$0xf] %v1156
          %1189 = vst [vmem:[%s261 + $0x3c] sm:$0xf] %v1157
          %1190 = vst [vmem:[%s261 + $0x40] sm:$0xf] %v1158
          %1191 = vst [vmem:[%s261 + $0x44] sm:$0xf] %v1159
          %1192 = vst [vmem:[%s261 + $0x48] sm:$0xf] %v1160
          %1193 = vst [vmem:[%s261 + $0x4c] sm:$0xf] %v1161
          %1194 = vst [vmem:[%s261 + $0x50] sm:$0xf] %v1162
          %1195 = vst [vmem:[%s261 + $0x54] sm:$0xf] %v1163
          %1196 = vst [vmem:[%s261 + $0x58] sm:$0xf] %v1164
          %1197 = vst [vmem:[%s261 + $0x5c] sm:$0xf] %v1165
          %1198 = vst [vmem:[%s261 + $0x60] sm:$0xf] %v1166
          %1199 = vst [vmem:[%s261 + $0x64] sm:$0xf] %v1167
          %1200 = vst [vmem:[%s261 + $0x68] sm:$0xf] %v1168
          %1201 = vst [vmem:[%s261 + $0x6c] sm:$0xf] %v1169
          %1202 = vst [vmem:[%s261 + $0x70] sm:$0xf] %v1170
          %1203 = vst [vmem:[%s261 + $0x74] sm:$0xf] %v1171
          %1204 = vst [vmem:[%s261 + $0x78] sm:$0xf] %v1172
          %1205 = vst [vmem:[%s261 + $0x7c] sm:$0xf] %v1173
        $region63: #{sgc_net_forward.2} parent=50 // pred_fallthru
          _
        %s1206 = smul.u32 32, %s18
        %p1207 = scmp.lt.s32.totalorder %s1206, 63
        %s1208 = scalar_select %p1207, %s1206, 63
        %s1209 = smul.addr %s1208, 4
        %s1210 = scalar_lea.vmem %s3, %s1209
        // Predicated region
        $region64: #{sgc_net_forward.2} parent=50 // pred_check
          %p1211 = pneg %p119
        $region65: #{sgc_net_forward.2} parent=50 // pred_check_branch
          %1213 = sbr.rel (%p1211) target = $region67
        $region66: #{sgc_net_forward.2} parent=50 // pred_region
          %s1214 = smul.u32 32, %s18
        $region67: #{sgc_net_forward.2} parent=50 // pred_fallthru
          _
      $region51: #{sgc_net_forward.2} parent=5 // pred_fallthru
        _
      %p1215 = scmp.le.s32.totalorder 2, %s9
      // Predicated region
      $region68: #{sgc_net_forward.2} parent=5 // pred_check
        %p1216 = pneg %p1215
      $region69: #{sgc_net_forward.2} parent=5 // pred_check_branch
        %1218 = sbr.rel (%p1216) target = $region71
      $region70: #{sgc_net_forward.2} parent=5 // pred_region
        %s1219 = ssub.s32 %s9, 2
        // Predicated region
        $region72: #{sgc_net_forward.2} parent=70 // pred_check
          %p1220 = pneg %p125
        $region73: #{sgc_net_forward.2} parent=70 // pred_check_branch
          %1222 = sbr.rel (%p1220) target = $region75
        $region74: #{sgc_net_forward.2} parent=70 // pred_region
          %s1223 = smul.u32 32, %s20
          %p1224 = scmp.lt.s32.totalorder %s1223, 63
          %s1225 = scalar_select %p1224, %s1223, 63
          %s1226 = smul.addr %s1225, 4
          %s1227 = scalar_lea.vmem %s3, %s1226
        $region75: #{sgc_net_forward.2} parent=70 // pred_fallthru
          _
      $region71: #{sgc_net_forward.2} parent=5 // pred_fallthru
        _
    $region6: #{sgc_net_forward.2} parent=1 // loop_footer
      %s13 = sadd.s32 1, %s9
    $region7: #{sgc_net_forward.2} parent=1 // loop_footer_branch
      %8 = sbr.rel target = $region3
    $region8: #{sgc_net_forward.2} parent=1 // loop_exit
      _

// kernel: sgc_net_forward.3
$region0: #{sgc_net_forward.3}
  #allocation0 [shape = 'u32[]', space=smem, size = 0x4, offset = 0x4, fixed_abs, tag = 'smem constant byte address 0x4 - core index']
  #allocation1 [shape = 'u32[72,128]{1,0:T(1,128)}', space=vmem, size = 0x9000, scoped, tag = 'internal scratch']
  #allocation2 [shape = 'f32[256,128]{1,0:T(8,128)}', space=vmem, size = 0x20000, scoped, tag = 'scratch operand']
  %s0 = inlined_call_operand.vmem [shape: s8[512,512], index: 0, kind: input, shape index: {}]
  %s1 = inlined_call_operand.vmem [shape: bf16[512,128], index: 1, kind: input, shape index: {}]
  %s2 = inlined_call_operand.vmem [shape: f32[512,1], index: 2, kind: input, shape index: {}]
  %s3 = inlined_call_operand.vmem [shape: bf16[128,128], index: 3, kind: input, shape index: {}]
  %s4 = inlined_call_operand.vmem [shape: f32[1,128], index: 4, kind: input, shape index: {}]
  %s5 = inlined_call_operand.vmem [shape: f32[512,128], index: 5, kind: output, shape index: {}]
  %s6 = sld [smem:[#allocation0]]
  $region84: #{sgc_net_forward.3} parent=0
    _
  %s8 = ssub.s32 1, %s6
  %s9 = scalar_select 0, %s8, %s6
  $region1: #{sgc_net_forward.3} parent=0
    #allocation3 [shape = 'u8[131072]{0}', space=vmem, size = 0x20000, scoped, tag = 'input window, operand 0']
    loop: start=0, step=1, limit=6
    $region2: #{sgc_net_forward.3} parent=1 // loop_pre_header
      _
    $region3: #{sgc_net_forward.3} parent=1 // loop_header
      %s11 = sphi 0, %s15
      %p12 = scmp.ge.s32.totalorder %s11, 6
      %s18 = sphi 0, %s30
      %s19 = sphi 0, %s26
      %s20 = sphi 0, %s18
      %s21 = sphi 0, %s19
      %s22 = sphi 0, %s20
      %s23 = sphi 0, %s21
      %s35 = sphi 0, %s37
      %s38 = sphi 0, %s35
      %s39 = sphi 0, %s38
      %s55 = sphi 0, %s39
      %s59 = sphi 0, %s59
      %s61 = sphi 0, %s59
      %s62 = sphi 0, %s61
      %s76 = sphi 0, %s62
      %s82 = sphi 0, %s84
      %s85 = sphi 0, %s82
      %s86 = sphi 0, %s85
      %s102 = sphi 0, %s86
      %s106 = sphi 0, %s106
      %s108 = sphi 0, %s106
      %s109 = sphi 0, %s108
      %s123 = sphi 0, %s109
      %s127 = sphi 0, %s127
      %s129 = sphi 0, %s127
      %s130 = sphi 0, %s129
      %s144 = sphi 0, %s130
      %s150 = sphi 0, %s152
      %s153 = sphi 0, %s150
      %s154 = sphi 0, %s153
      %s170 = sphi 0, %s154
    $region4: #{sgc_net_forward.3} parent=1 // loop_header_branch
      %14 = sbr.rel (%p12) target = $region8
    $region5: #{sgc_net_forward.3} parent=1 // loop_body
      %s16 = ssub.s32 %s11, 1
      %s17 = ssub.s32 %s11, 2
      %s24 = sadd.s32 1, %s19
      %p25 = scmp.ge.s32.totalorder %s24, 2
      %s26 = scalar_select %p25, 0, %s24
      %s27 = sadd.s32 1, %s18
      %s28 = scalar_select %p25, %s27, %s18
      %p29 = scmp.ge.s32.totalorder %s28, 2
      %s30 = scalar_select %p29, 0, %s28
      %s31 = ssub.s32 %s18, %s30
      %s32 = ssub.s32 %s19, %s26
      %s33 = sor.u32 %s31, %s32
      %p34 = scmp.eq.s32.totalorder %s33, 0
      %s36 = sadd.s32 %s35, 1
      %s37 = scalar_select %p34, %s35, %s36
      %p40 = pneg %p34
      %p41 = scmp.eq.s32.totalorder %s11, 3
      %p42 = por %p40, %p41
      %p43 = scmp.ne.s32.totalorder %s35, %s38
      %p44 = scmp.eq.s32.totalorder %s11, 0
      %p45 = por %p43, %p44
      %p46 = scmp.ne.s32.totalorder %s35, %s38
      %p47 = scmp.eq.s32.totalorder %s16, 3
      %p48 = por %p46, %p47
      %p49 = scmp.ne.s32.totalorder %s38, %s39
      %p50 = scmp.eq.s32.totalorder %s16, 0
      %p51 = por %p49, %p50
      %p52 = scmp.ne.s32.totalorder %s38, %s39
      %p53 = scmp.eq.s32.totalorder %s17, 3
      %p54 = por %p52, %p53
      %p56 = scmp.ne.s32.totalorder %s39, %s55
      %p57 = scmp.eq.s32.totalorder %s17, 0
      %p58 = por %p56, %p57
      %s60 = sadd.s32 %s59, 1
      %p63 = scmp.eq.s32.totalorder %s11, 3
      %p64 = scmp.ne.s32.totalorder %s59, %s61
      %p65 = scmp.eq.s32.totalorder %s11, 0
      %p66 = por %p64, %p65
      %p67 = scmp.ne.s32.totalorder %s59, %s61
      %p68 = scmp.eq.s32.totalorder %s16, 3
      %p69 = por %p67, %p68
      %p70 = scmp.ne.s32.totalorder %s61, %s62
      %p71 = scmp.eq.s32.totalorder %s16, 0
      %p72 = por %p70, %p71
      %p73 = scmp.ne.s32.totalorder %s61, %s62
      %p74 = scmp.eq.s32.totalorder %s17, 3
      %p75 = por %p73, %p74
      %p77 = scmp.ne.s32.totalorder %s62, %s76
      %p78 = scmp.eq.s32.totalorder %s17, 0
      %p79 = por %p77, %p78
      %s80 = ssub.s32 %s18, %s30
      %p81 = scmp.eq.s32.totalorder %s80, 0
      %s83 = sadd.s32 %s82, 1
      %s84 = scalar_select %p81, %s82, %s83
      %p87 = pneg %p81
      %p88 = scmp.eq.s32.totalorder %s11, 3
      %p89 = por %p87, %p88
      %p90 = scmp.ne.s32.totalorder %s82, %s85
      %p91 = scmp.eq.s32.totalorder %s11, 0
      %p92 = por %p90, %p91
      %p93 = scmp.ne.s32.totalorder %s82, %s85
      %p94 = scmp.eq.s32.totalorder %s16, 3
      %p95 = por %p93, %p94
      %p96 = scmp.ne.s32.totalorder %s85, %s86
      %p97 = scmp.eq.s32.totalorder %s16, 0
      %p98 = por %p96, %p97
      %p99 = scmp.ne.s32.totalorder %s85, %s86
      %p100 = scmp.eq.s32.totalorder %s17, 3
      %p101 = por %p99, %p100
      %p103 = scmp.ne.s32.totalorder %s86, %s102
      %p104 = scmp.eq.s32.totalorder %s17, 0
      %p105 = por %p103, %p104
      %s107 = sadd.s32 %s106, 1
      %p110 = scmp.eq.s32.totalorder %s11, 3
      %p111 = scmp.ne.s32.totalorder %s106, %s108
      %p112 = scmp.eq.s32.totalorder %s11, 0
      %p113 = por %p111, %p112
      %p114 = scmp.ne.s32.totalorder %s106, %s108
      %p115 = scmp.eq.s32.totalorder %s16, 3
      %p116 = por %p114, %p115
      %p117 = scmp.ne.s32.totalorder %s108, %s109
      %p118 = scmp.eq.s32.totalorder %s16, 0
      %p119 = por %p117, %p118
      %p120 = scmp.ne.s32.totalorder %s108, %s109
      %p121 = scmp.eq.s32.totalorder %s17, 3
      %p122 = por %p120, %p121
      %p124 = scmp.ne.s32.totalorder %s109, %s123
      %p125 = scmp.eq.s32.totalorder %s17, 0
      %p126 = por %p124, %p125
      %s128 = sadd.s32 %s127, 1
      %p131 = scmp.eq.s32.totalorder %s11, 3
      %p132 = scmp.ne.s32.totalorder %s127, %s129
      %p133 = scmp.eq.s32.totalorder %s11, 0
      %p134 = por %p132, %p133
      %p135 = scmp.ne.s32.totalorder %s127, %s129
      %p136 = scmp.eq.s32.totalorder %s16, 3
      %p137 = por %p135, %p136
      %p138 = scmp.ne.s32.totalorder %s129, %s130
      %p139 = scmp.eq.s32.totalorder %s16, 0
      %p140 = por %p138, %p139
      %p141 = scmp.ne.s32.totalorder %s129, %s130
      %p142 = scmp.eq.s32.totalorder %s17, 3
      %p143 = por %p141, %p142
      %p145 = scmp.ne.s32.totalorder %s130, %s144
      %p146 = scmp.eq.s32.totalorder %s17, 0
      %p147 = por %p145, %p146
      %s148 = ssub.s32 %s18, %s30
      %p149 = scmp.eq.s32.totalorder %s148, 0
      %s151 = sadd.s32 %s150, 1
      %s152 = scalar_select %p149, %s150, %s151
      %p155 = pneg %p149
      %p156 = scmp.eq.s32.totalorder %s11, 3
      %p157 = por %p155, %p156
      %p158 = scmp.ne.s32.totalorder %s150, %s153
      %p159 = scmp.eq.s32.totalorder %s11, 0
      %p160 = por %p158, %p159
      %p161 = scmp.ne.s32.totalorder %s150, %s153
      %p162 = scmp.eq.s32.totalorder %s16, 3
      %p163 = por %p161, %p162
      %p164 = scmp.ne.s32.totalorder %s153, %s154
      %p165 = scmp.eq.s32.totalorder %s16, 0
      %p166 = por %p164, %p165
      %p167 = scmp.ne.s32.totalorder %s153, %s154
      %p168 = scmp.eq.s32.totalorder %s17, 3
      %p169 = por %p167, %p168
      %p171 = scmp.ne.s32.totalorder %s154, %s170
      %p172 = scmp.eq.s32.totalorder %s17, 0
      %p173 = por %p171, %p172
      %p174 = scmp.le.s32.totalorder 1, %s11
      %p175 = scmp.lt.s32.totalorder %s11, 5
      %p176 = pnand %p174, %p175
      %p177 = pneg %p176
      // Predicated region
      $region9: #{sgc_net_forward.3} parent=5 // pred_check
        _
      $region10: #{sgc_net_forward.3} parent=5 // pred_check_branch
        %179 = sbr.rel (%p176) target = $region12
      $region11: #{sgc_net_forward.3} parent=5 // pred_region
        %s180 = ssub.s32 %s11, 1
        // Predicated region
        $region13: #{sgc_net_forward.3} parent=11 // pred_check
          %p181 = pneg %p72
        $region14: #{sgc_net_forward.3} parent=11 // pred_check_branch
          %183 = sbr.rel (%p181) target = $region16
        $region15: #{sgc_net_forward.3} parent=11 // pred_region
          _
        $region16: #{sgc_net_forward.3} parent=11 // pred_fallthru
          _
        // Predicated region
        $region17: #{sgc_net_forward.3} parent=11 // pred_check
          %p184 = pneg %p119
        $region18: #{sgc_net_forward.3} parent=11 // pred_check_branch
          %186 = sbr.rel (%p184) target = $region20
        $region19: #{sgc_net_forward.3} parent=11 // pred_region
          _
        $region20: #{sgc_net_forward.3} parent=11 // pred_fallthru
          _
        // Predicated region
        $region21: #{sgc_net_forward.3} parent=11 // pred_check
          %p187 = pneg %p140
        $region22: #{sgc_net_forward.3} parent=11 // pred_check_branch
          %189 = sbr.rel (%p187) target = $region24
        $region23: #{sgc_net_forward.3} parent=11 // pred_region
          _
        $region24: #{sgc_net_forward.3} parent=11 // pred_fallthru
          _
      $region12: #{sgc_net_forward.3} parent=5 // pred_fallthru
        _
      %p190 = scmp.lt.s32.totalorder %s11, 4
      // Predicated region
      $region25: #{sgc_net_forward.3} parent=5 // pred_check
        %p191 = pneg %p190
      $region26: #{sgc_net_forward.3} parent=5 // pred_check_branch
        %193 = sbr.rel (%p191) target = $region28
      $region27: #{sgc_net_forward.3} parent=5 // pred_region
        // Predicated region
        $region29: #{sgc_net_forward.3} parent=27 // pred_check
          %p194 = pneg %p45
        $region30: #{sgc_net_forward.3} parent=27 // pred_check_branch
          %196 = sbr.rel (%p194) target = $region32
        $region31: #{sgc_net_forward.3} parent=27 // pred_region
          %s197 = sand.u32 %s35, 1
          %s198 = sand.u32 %s35, 1
          %s199 = smul.addr %s198, 128
          %s200 = scalar_lea.vmem [#allocation3], %s199
          %s201 = smul.u32 8, %s18
          %s202 = smul.u32 2, %s19
          %s203 = smul.addr %s201, 4
          %s204 = sadd.s32 %s202, %s203
          %s205 = smul.addr %s204, 8
          %s206 = scalar_lea.vmem %s0, %s205
          // Predicated region
          $region33: #{sgc_net_forward.3} parent=31 // pred_check
            _
          $region34: #{sgc_net_forward.3} parent=31 // pred_check_branch
            %208 = sbr.rel (0) target = $region36
          $region35: #{sgc_net_forward.3} parent=31 // pred_region
            // Predicated region
            $region37: #{sgc_net_forward.3} parent=35 // pred_check
              _
            $region38: #{sgc_net_forward.3} parent=35 // pred_check_branch
              %210 = sbr.rel (0) target = $region40
            $region39: #{sgc_net_forward.3} parent=35 // pred_region
              loop: start=0, step=1, limit=1
              $region41: #{sgc_net_forward.3} parent=39 // loop_pre_header
                _
              $region42: #{sgc_net_forward.3} parent=39 // loop_header
                %s212 = sphi 0, %s216
                %p213 = scmp.ge.s32.totalorder %s212, 1
                %s217 = sphi %s206, %s206
                %s218 = sphi %s200, %s200
              $region43: #{sgc_net_forward.3} parent=39 // loop_header_branch
                %215 = sbr.rel (%p213) target = $region47
              $region44: #{sgc_net_forward.3} parent=39 // loop_body
                %v219 = vld [vmem:[%s217] sm:$0xff]
                %220 = vst [vmem:[%s218] sm:$0xff] %v219
                %v221 = vld [vmem:[%s217 + $0x8] sm:$0xff]
                %222 = vst [vmem:[%s218 + $0x8] sm:$0xff] %v221
                %v223 = vld [vmem:[%s217 + $0x20] sm:$0xff]
                %224 = vst [vmem:[%s218 + $0x10] sm:$0xff] %v223
                %v225 = vld [vmem:[%s217 + $0x28] sm:$0xff]
                %226 = vst [vmem:[%s218 + $0x18] sm:$0xff] %v225
                %v227 = vld [vmem:[%s217 + $0x40] sm:$0xff]
                %228 = vst [vmem:[%s218 + $0x20] sm:$0xff] %v227
                %v229 = vld [vmem:[%s217 + $0x48] sm:$0xff]
                %230 = vst [vmem:[%s218 + $0x28] sm:$0xff] %v229
                %v231 = vld [vmem:[%s217 + $0x60] sm:$0xff]
                %232 = vst [vmem:[%s218 + $0x30] sm:$0xff] %v231
                %v233 = vld [vmem:[%s217 + $0x68] sm:$0xff]
                %234 = vst [vmem:[%s218 + $0x38] sm:$0xff] %v233
                %v235 = vld [vmem:[%s217 + $0x80] sm:$0xff]
                %236 = vst [vmem:[%s218 + $0x40] sm:$0xff] %v235
                %v237 = vld [vmem:[%s217 + $0x88] sm:$0xff]
                %238 = vst [vmem:[%s218 + $0x48] sm:$0xff] %v237
                %v239 = vld [vmem:[%s217 + $0xa0] sm:$0xff]
                %240 = vst [vmem:[%s218 + $0x50] sm:$0xff] %v239
                %v241 = vld [vmem:[%s217 + $0xa8] sm:$0xff]
                %242 = vst [vmem:[%s218 + $0x58] sm:$0xff] %v241
                %v243 = vld [vmem:[%s217 + $0xc0] sm:$0xff]
                %244 = vst [vmem:[%s218 + $0x60] sm:$0xff] %v243
                %v245 = vld [vmem:[%s217 + $0xc8] sm:$0xff]
                %246 = vst [vmem:[%s218 + $0x68] sm:$0xff] %v245
                %v247 = vld [vmem:[%s217 + $0xe0] sm:$0xff]
                %248 = vst [vmem:[%s218 + $0x70] sm:$0xff] %v247
                %v249 = vld [vmem:[%s217 + $0xe8] sm:$0xff]
                %250 = vst [vmem:[%s218 + $0x78] sm:$0xff] %v249
              $region45: #{sgc_net_forward.3} parent=39 // loop_footer
                %s216 = sadd.s32 1, %s212
              $region46: #{sgc_net_forward.3} parent=39 // loop_footer_branch
                %211 = sbr.rel target = $region42
              $region47: #{sgc_net_forward.3} parent=39 // loop_exit
                _
            $region40: #{sgc_net_forward.3} parent=35 // pred_fallthru
              _
            // Predicated region
            $region48: #{sgc_net_forward.3} parent=35 // pred_check
              _
            $region49: #{sgc_net_forward.3} parent=35 // pred_check_branch
              %252 = sbr.rel target = $region51
            $region50: #{sgc_net_forward.3} parent=35 // pred_region
              _
            $region51: #{sgc_net_forward.3} parent=35 // pred_fallthru
              _
          $region36: #{sgc_net_forward.3} parent=31 // pred_fallthru
            _
          %253 = vnop
        $region32: #{sgc_net_forward.3} parent=27 // pred_fallthru
          _
        // Predicated region
        $region52: #{sgc_net_forward.3} parent=27 // pred_check
          %p254 = pneg %p92
        $region53: #{sgc_net_forward.3} parent=27 // pred_check_branch
          %256 = sbr.rel (%p254) target = $region55
        $region54: #{sgc_net_forward.3} parent=27 // pred_region
          %s257 = smul.u32 32, %s18
          %p258 = scmp.lt.s32.totalorder %s257, 63
          %s259 = scalar_select %p258, %s257, 63
          %s260 = smul.addr %s259, 8
          %s261 = scalar_lea.vmem %s2, %s260
          %s262 = smul.u32 32, %s18
        $region55: #{sgc_net_forward.3} parent=27 // pred_fallthru
          _
      $region28: #{sgc_net_forward.3} parent=5 // pred_fallthru
        _
      %p263 = scmp.le.s32.totalorder 1, %s11
      %p264 = scmp.lt.s32.totalorder %s11, 5
      %p265 = pnand %p263, %p264
      %p266 = pneg %p265
      // Predicated region
      $region56: #{sgc_net_forward.3} parent=5 // pred_check
        _
      $region57: #{sgc_net_forward.3} parent=5 // pred_check_branch
        %268 = sbr.rel (%p265) target = $region59
      $region58: #{sgc_net_forward.3} parent=5 // pred_region
        %s269 = ssub.s32 %s11, 1
        %s270 = sand.u32 %s38, 1
        %s271 = sand.u32 %s38, 1
        %s272 = smul.addr %s271, 128
        %s273 = scalar_lea.vmem [#allocation3], %s272
        // Predicated region
        $region60: #{sgc_net_forward.3} parent=58 // pred_check
          %p274 = pneg %p51
        $region61: #{sgc_net_forward.3} parent=58 // pred_check_branch
          %276 = sbr.rel (%p274) target = $region63
        $region62: #{sgc_net_forward.3} parent=58 // pred_region
          _
        $region63: #{sgc_net_forward.3} parent=58 // pred_fallthru
          _
        %s277 = sand.u32 %s38, 1
        %s278 = sand.u32 %s38, 1
        %s279 = smul.addr %s278, 128
        %s280 = scalar_lea.vmem [#allocation3], %s279
        %p281 = pneg %p51
        %p282 = pneg %p48
        %p283 = pneg %p72
        %p284 = pneg %p69
        %s285 = smul.u32 32, %s20
        %p286 = scmp.lt.s32.totalorder %s285, 63
        %s287 = scalar_select %p286, %s285, 63
        %s288 = smul.addr %s287, 8
        %s289 = scalar_lea.vmem %s2, %s288
        %p290 = pneg %p98
        %p291 = pneg %p95
        %p292 = pneg %p119
        %p293 = pneg %p116
        %p294 = pneg %p140
        %p295 = pneg %p137
        %p296 = pneg %p166
        %p297 = pneg %p163
        %s298 = smul.u32 32, %s20
        %p299 = scmp.lt.s32.totalorder %s298, 63
        %s300 = scalar_select %p299, %s298, 63
        %s301 = smul.addr %s300, 8
        %s302 = scalar_lea.vmem %s5, %s301
        %s303 = smul.u32 8, %s20
        %s304 = smul.u32 2, %s21
        %s305 = smul.u32 32, %s20
        %p306 = scmp.lt.s32.totalorder %s305, 63
        %s307 = scalar_select %p306, %s305, 63
        %s308 = smul.addr %s307, 8
        %s309 = scalar_lea.vmem %s2, %s308
        %s310 = smul.u32 32, %s20
        %s311 = smul.u32 32, %s20
        %p312 = scmp.lt.s32.totalorder %s311, 63
        %s313 = scalar_select %p312, %s311, 63
        %s314 = smul.addr %s313, 8
        %s315 = scalar_lea.vmem %s5, %s314
        %s316 = smul.u32 32, %s20
        %p317 = scmp.eq.s32.totalorder %s21, 0
        // Predicated region
        $region64: #{sgc_net_forward.3} parent=58 // pred_check
          %p318 = pneg %p317
        $region65: #{sgc_net_forward.3} parent=58 // pred_check_branch
          %320 = sbr.rel (%p318) target = $region67
        $region66: #{sgc_net_forward.3} parent=58 // pred_region
          %321 = vst [vmem:[#allocation2] sm:$0xff] 0.0
          %322 = vst [vmem:[#allocation2 + $0x8] sm:$0xff] 0.0
          %323 = vst [vmem:[#allocation2 + $0x10] sm:$0xff] 0.0
          %324 = vst [vmem:[#allocation2 + $0x18] sm:$0xff] 0.0
          %325 = vst [vmem:[#allocation2 + $0x20] sm:$0xff] 0.0
          %326 = vst [vmem:[#allocation2 + $0x28] sm:$0xff] 0.0
          %327 = vst [vmem:[#allocation2 + $0x30] sm:$0xff] 0.0
          %328 = vst [vmem:[#allocation2 + $0x38] sm:$0xff] 0.0
          %329 = vst [vmem:[#allocation2 + $0x40] sm:$0xff] 0.0
          %330 = vst [vmem:[#allocation2 + $0x48] sm:$0xff] 0.0
          %331 = vst [vmem:[#allocation2 + $0x50] sm:$0xff] 0.0
          %332 = vst [vmem:[#allocation2 + $0x58] sm:$0xff] 0.0
          %333 = vst [vmem:[#allocation2 + $0x60] sm:$0xff] 0.0
          %334 = vst [vmem:[#allocation2 + $0x68] sm:$0xff] 0.0
          %335 = vst [vmem:[#allocation2 + $0x70] sm:$0xff] 0.0
          %336 = vst [vmem:[#allocation2 + $0x78] sm:$0xff] 0.0
          %337 = vst [vmem:[#allocation2 + $0x80] sm:$0xff] 0.0
          %338 = vst [vmem:[#allocation2 + $0x88] sm:$0xff] 0.0
          %339 = vst [vmem:[#allocation2 + $0x90] sm:$0xff] 0.0
          %340 = vst [vmem:[#allocation2 + $0x98] sm:$0xff] 0.0
          %341 = vst [vmem:[#allocation2 + $0xa0] sm:$0xff] 0.0
          %342 = vst [vmem:[#allocation2 + $0xa8] sm:$0xff] 0.0
          %343 = vst [vmem:[#allocation2 + $0xb0] sm:$0xff] 0.0
          %344 = vst [vmem:[#allocation2 + $0xb8] sm:$0xff] 0.0
          %345 = vst [vmem:[#allocation2 + $0xc0] sm:$0xff] 0.0
          %346 = vst [vmem:[#allocation2 + $0xc8] sm:$0xff] 0.0
          %347 = vst [vmem:[#allocation2 + $0xd0] sm:$0xff] 0.0
          %348 = vst [vmem:[#allocation2 + $0xd8] sm:$0xff] 0.0
          %349 = vst [vmem:[#allocation2 + $0xe0] sm:$0xff] 0.0
          %350 = vst [vmem:[#allocation2 + $0xe8] sm:$0xff] 0.0
          %351 = vst [vmem:[#allocation2 + $0xf0] sm:$0xff] 0.0
          %352 = vst [vmem:[#allocation2 + $0xf8] sm:$0xff] 0.0
        $region67: #{sgc_net_forward.3} parent=58 // pred_fallthru
          _
        %v353 = vld [vmem:[%s273] sm:$0xff]
        %v354 = vld [vmem:[%s273 + $0x8] sm:$0xff]
        %v355 = vld [vmem:[%s273 + $0x10] sm:$0xff]
        %v356 = vld [vmem:[%s273 + $0x18] sm:$0xff]
        %v357 = vld [vmem:[%s273 + $0x20] sm:$0xff]
        %v358 = vld [vmem:[%s273 + $0x28] sm:$0xff]
        %v359 = vld [vmem:[%s273 + $0x30] sm:$0xff]
        %v360 = vld [vmem:[%s273 + $0x38] sm:$0xff]
        %v361 = vld [vmem:[%s273 + $0x40] sm:$0xff]
        %v362 = vld [vmem:[%s273 + $0x48] sm:$0xff]
        %v363 = vld [vmem:[%s273 + $0x50] sm:$0xff]
        %v364 = vld [vmem:[%s273 + $0x58] sm:$0xff]
        %v365 = vld [vmem:[%s273 + $0x60] sm:$0xff]
        %v366 = vld [vmem:[%s273 + $0x68] sm:$0xff]
        %v367 = vld [vmem:[%s273 + $0x70] sm:$0xff]
        %v368 = vld [vmem:[%s273 + $0x78] sm:$0xff]
        %v369 = vunpack.c.0.s8 %v353
        %v370 = vunpack.c.0.s8 %v354
        %v371 = vunpack.c.1.s8 %v353
        %v372 = vunpack.c.1.s8 %v354
        %v373 = vunpack.c.2.s8 %v353
        %v374 = vunpack.c.2.s8 %v354
        %v375 = vunpack.c.3.s8 %v353
        %v376 = vunpack.c.3.s8 %v354
        %v377 = vunpack.c.0.s8 %v355
        %v378 = vunpack.c.0.s8 %v356
        %v379 = vunpack.c.1.s8 %v355
        %v380 = vunpack.c.1.s8 %v356
        %v381 = vunpack.c.2.s8 %v355
        %v382 = vunpack.c.2.s8 %v356
        %v383 = vunpack.c.3.s8 %v355
        %v384 = vunpack.c.3.s8 %v356
        %v385 = vunpack.c.0.s8 %v357
        %v386 = vunpack.c.0.s8 %v358
        %v387 = vunpack.c.1.s8 %v357
        %v388 = vunpack.c.1.s8 %v358
        %v389 = vunpack.c.2.s8 %v357
        %v390 = vunpack.c.2.s8 %v358
        %v391 = vunpack.c.3.s8 %v357
        %v392 = vunpack.c.3.s8 %v358
        %v393 = vunpack.c.0.s8 %v359
        %v394 = vunpack.c.0.s8 %v360
        %v395 = vunpack.c.1.s8 %v359
        %v396 = vunpack.c.1.s8 %v360
        %v397 = vunpack.c.2.s8 %v359
        %v398 = vunpack.c.2.s8 %v360
        %v399 = vunpack.c.3.s8 %v359
        %v400 = vunpack.c.3.s8 %v360
        %v401 = vunpack.c.0.s8 %v361
        %v402 = vunpack.c.0.s8 %v362
        %v403 = vunpack.c.1.s8 %v361
        %v404 = vunpack.c.1.s8 %v362
        %v405 = vunpack.c.2.s8 %v361
        %v406 = vunpack.c.2.s8 %v362
        %v407 = vunpack.c.3.s8 %v361
        %v408 = vunpack.c.3.s8 %v362
        %v409 = vunpack.c.0.s8 %v363
        %v410 = vunpack.c.0.s8 %v364
        %v411 = vunpack.c.1.s8 %v363
        %v412 = vunpack.c.1.s8 %v364
        %v413 = vunpack.c.2.s8 %v363
        %v414 = vunpack.c.2.s8 %v364
        %v415 = vunpack.c.3.s8 %v363
        %v416 = vunpack.c.3.s8 %v364
        %v417 = vunpack.c.0.s8 %v365
        %v418 = vunpack.c.0.s8 %v366
        %v419 = vunpack.c.1.s8 %v365
        %v420 = vunpack.c.1.s8 %v366
        %v421 = vunpack.c.2.s8 %v365
        %v422 = vunpack.c.2.s8 %v366
        %v423 = vunpack.c.3.s8 %v365
        %v424 = vunpack.c.3.s8 %v366
        %v425 = vunpack.c.0.s8 %v367
        %v426 = vunpack.c.0.s8 %v368
        %v427 = vunpack.c.1.s8 %v367
        %v428 = vunpack.c.1.s8 %v368
        %v429 = vunpack.c.2.s8 %v367
        %v430 = vunpack.c.2.s8 %v368
        %v431 = vunpack.c.3.s8 %v367
        %v432 = vunpack.c.3.s8 %v368
        %v433 = vcvt.s32.f32 %v369
        %v434 = vcvt.s32.f32 %v370
        %v435 = vcvt.s32.f32 %v371
        %v436 = vcvt.s32.f32 %v372
        %v437 = vcvt.s32.f32 %v373
        %v438 = vcvt.s32.f32 %v374
        %v439 = vcvt.s32.f32 %v375
        %v440 = vcvt.s32.f32 %v376
        %v441 = vcvt.s32.f32 %v377
        %v442 = vcvt.s32.f32 %v378
        %v443 = vcvt.s32.f32 %v379
        %v444 = vcvt.s32.f32 %v380
        %v445 = vcvt.s32.f32 %v381
        %v446 = vcvt.s32.f32 %v382
        %v447 = vcvt.s32.f32 %v383
        %v448 = vcvt.s32.f32 %v384
        %v449 = vcvt.s32.f32 %v385
        %v450 = vcvt.s32.f32 %v386
        %v451 = vcvt.s32.f32 %v387
        %v452 = vcvt.s32.f32 %v388
        %v453 = vcvt.s32.f32 %v389
        %v454 = vcvt.s32.f32 %v390
        %v455 = vcvt.s32.f32 %v391
        %v456 = vcvt.s32.f32 %v392
        %v457 = vcvt.s32.f32 %v393
        %v458 = vcvt.s32.f32 %v394
        %v459 = vcvt.s32.f32 %v395
        %v460 = vcvt.s32.f32 %v396
        %v461 = vcvt.s32.f32 %v397
        %v462 = vcvt.s32.f32 %v398
        %v463 = vcvt.s32.f32 %v399
        %v464 = vcvt.s32.f32 %v400
        %v465 = vcvt.s32.f32 %v401
        %v466 = vcvt.s32.f32 %v402
        %v467 = vcvt.s32.f32 %v403
        %v468 = vcvt.s32.f32 %v404
        %v469 = vcvt.s32.f32 %v405
        %v470 = vcvt.s32.f32 %v406
        %v471 = vcvt.s32.f32 %v407
        %v472 = vcvt.s32.f32 %v408
        %v473 = vcvt.s32.f32 %v409
        %v474 = vcvt.s32.f32 %v410
        %v475 = vcvt.s32.f32 %v411
        %v476 = vcvt.s32.f32 %v412
        %v477 = vcvt.s32.f32 %v413
        %v478 = vcvt.s32.f32 %v414
        %v479 = vcvt.s32.f32 %v415
        %v480 = vcvt.s32.f32 %v416
        %v481 = vcvt.s32.f32 %v417
        %v482 = vcvt.s32.f32 %v418
        %v483 = vcvt.s32.f32 %v419
        %v484 = vcvt.s32.f32 %v420
        %v485 = vcvt.s32.f32 %v421
        %v486 = vcvt.s32.f32 %v422
        %v487 = vcvt.s32.f32 %v423
        %v488 = vcvt.s32.f32 %v424
        %v489 = vcvt.s32.f32 %v425
        %v490 = vcvt.s32.f32 %v426
        %v491 = vcvt.s32.f32 %v427
        %v492 = vcvt.s32.f32 %v428
        %v493 = vcvt.s32.f32 %v429
        %v494 = vcvt.s32.f32 %v430
        %v495 = vcvt.s32.f32 %v431
        %v496 = vcvt.s32.f32 %v432
        %v497 = vpack.c.bf16 %v435, %v433
        %v498 = vpack.c.bf16 %v436, %v434
        %v499 = vpack.c.bf16 %v439, %v437
        %v500 = vpack.c.bf16 %v440, %v438
        %v501 = vpack.c.bf16 %v443, %v441
        %v502 = vpack.c.bf16 %v444, %v442
        %v503 = vpack.c.bf16 %v447, %v445
        %v504 = vpack.c.bf16 %v448, %v446
        %v505 = vpack.c.bf16 %v451, %v449
        %v506 = vpack.c.bf16 %v452, %v450
        %v507 = vpack.c.bf16 %v455, %v453
        %v508 = vpack.c.bf16 %v456, %v454
        %v509 = vpack.c.bf16 %v459, %v457
        %v510 = vpack.c.bf16 %v460, %v458
        %v511 = vpack.c.bf16 %v463, %v461
        %v512 = vpack.c.bf16 %v464, %v462
        %v513 = vpack.c.bf16 %v467, %v465
        %v514 = vpack.c.bf16 %v468, %v466
        %v515 = vpack.c.bf16 %v471, %v469
        %v516 = vpack.c.bf16 %v472, %v470
        %v517 = vpack.c.bf16 %v475, %v473
        %v518 = vpack.c.bf16 %v476, %v474
        %v519 = vpack.c.bf16 %v479, %v477
        %v520 = vpack.c.bf16 %v480, %v478
        %v521 = vpack.c.bf16 %v483, %v481
        %v522 = vpack.c.bf16 %v484, %v482
        %v523 = vpack.c.bf16 %v487, %v485
        %v524 = vpack.c.bf16 %v488, %v486
        %v525 = vpack.c.bf16 %v491, %v489
        %v526 = vpack.c.bf16 %v492, %v490
        %v527 = vpack.c.bf16 %v495, %v493
        %v528 = vpack.c.bf16 %v496, %v494
        %s529 = smul.u32 %s21, 256
        %s530 = sshra.s32 %s529, 3
        %s531 = sand.u32 %s529, 7
        %s532 = smul.addr %s530, 4
        %s533 = scalar_lea.vmem %s1, %s532
        %v534 = vld [vmem:[%s533] sm:$0xf]
        %v535 = vld [vmem:[%s533 + $0x4] sm:$0xf]
        %v536 = vld [vmem:[%s533 + $0x8] sm:$0xf]
        %v537 = vld [vmem:[%s533 + $0xc] sm:$0xf]
        %v538 = vld [vmem:[%s533 + $0x10] sm:$0xf]
        %v539 = vld [vmem:[%s533 + $0x14] sm:$0xf]
        %v540 = vld [vmem:[%s533 + $0x18] sm:$0xf]
        %v541 = vld [vmem:[%s533 + $0x1c] sm:$0xf]
        %v542 = vld [vmem:[%s533 + $0x20] sm:$0xf]
        %v543 = vld [vmem:[%s533 + $0x24] sm:$0xf]
        %v544 = vld [vmem:[%s533 + $0x28] sm:$0xf]
        %v545 = vld [vmem:[%s533 + $0x2c] sm:$0xf]
        %v546 = vld [vmem:[%s533 + $0x30] sm:$0xf]
        %v547 = vld [vmem:[%s533 + $0x34] sm:$0xf]
        %v548 = vld [vmem:[%s533 + $0x38] sm:$0xf]
        %v549 = vld [vmem:[%s533 + $0x3c] sm:$0xf]
        %v550 = vld [vmem:[%s533 + $0x40] sm:$0xf]
        %v551 = vld [vmem:[%s533 + $0x44] sm:$0xf]
        %v552 = vld [vmem:[%s533 + $0x48] sm:$0xf]
        %v553 = vld [vmem:[%s533 + $0x4c] sm:$0xf]
        %v554 = vld [vmem:[%s533 + $0x50] sm:$0xf]
        %v555 = vld [vmem:[%s533 + $0x54] sm:$0xf]
        %v556 = vld [vmem:[%s533 + $0x58] sm:$0xf]
        %v557 = vld [vmem:[%s533 + $0x5c] sm:$0xf]
        %v558 = vld [vmem:[%s533 + $0x60] sm:$0xf]
        %v559 = vld [vmem:[%s533 + $0x64] sm:$0xf]
        %v560 = vld [vmem:[%s533 + $0x68] sm:$0xf]
        %v561 = vld [vmem:[%s533 + $0x6c] sm:$0xf]
        %v562 = vld [vmem:[%s533 + $0x70] sm:$0xf]
        %v563 = vld [vmem:[%s533 + $0x74] sm:$0xf]
        %v564 = vld [vmem:[%s533 + $0x78] sm:$0xf]
        %v565 = vld [vmem:[%s533 + $0x7c] sm:$0xf]
        %v566 = vld [vmem:[#allocation2] sm:$0xff]
        %v567 = vld [vmem:[#allocation2 + $0x8] sm:$0xff]
        %v568 = vld [vmem:[#allocation2 + $0x10] sm:$0xff]
        %v569 = vld [vmem:[#allocation2 + $0x18] sm:$0xff]
        %v570 = vld [vmem:[#allocation2 + $0x20] sm:$0xff]
        %v571 = vld [vmem:[#allocation2 + $0x28] sm:$0xff]
        %v572 = vld [vmem:[#allocation2 + $0x30] sm:$0xff]
        %v573 = vld [vmem:[#allocation2 + $0x38] sm:$0xff]
        %v574 = vld [vmem:[#allocation2 + $0x40] sm:$0xff]
        %v575 = vld [vmem:[#allocation2 + $0x48] sm:$0xff]
        %v576 = vld [vmem:[#allocation2 + $0x50] sm:$0xff]
        %v577 = vld [vmem:[#allocation2 + $0x58] sm:$0xff]
        %v578 = vld [vmem:[#allocation2 + $0x60] sm:$0xff]
        %v579 = vld [vmem:[#allocation2 + $0x68] sm:$0xff]
        %v580 = vld [vmem:[#allocation2 + $0x70] sm:$0xff]
        %v581 = vld [vmem:[#allocation2 + $0x78] sm:$0xff]
        %v582 = vld [vmem:[#allocation2 + $0x80] sm:$0xff]
        %v583 = vld [vmem:[#allocation2 + $0x88] sm:$0xff]
        %v584 = vld [vmem:[#allocation2 + $0x90] sm:$0xff]
        %v585 = vld [vmem:[#allocation2 + $0x98] sm:$0xff]
        %v586 = vld [vmem:[#allocation2 + $0xa0] sm:$0xff]
        %v587 = vld [vmem:[#allocation2 + $0xa8] sm:$0xff]
        %v588 = vld [vmem:[#allocation2 + $0xb0] sm:$0xff]
        %v589 = vld [vmem:[#allocation2 + $0xb8] sm:$0xff]
        %v590 = vld [vmem:[#allocation2 + $0xc0] sm:$0xff]
        %v591 = vld [vmem:[#allocation2 + $0xc8] sm:$0xff]
        %v592 = vld [vmem:[#allocation2 + $0xd0] sm:$0xff]
        %v593 = vld [vmem:[#allocation2 + $0xd8] sm:$0xff]
        %v594 = vld [vmem:[#allocation2 + $0xe0] sm:$0xff]
        %v595 = vld [vmem:[#allocation2 + $0xe8] sm:$0xff]
        %v596 = vld [vmem:[#allocation2 + $0xf0] sm:$0xff]
        %v597 = vld [vmem:[#allocation2 + $0xf8] sm:$0xff]
        %v630 = vunpack.c.l.b16 %v534
        %v631 = vunpack.c.l.b16 %v535
        %v632 = vunpack.c.l.b16 %v536
        %v633 = vunpack.c.l.b16 %v537
        %v634 = vunpack.c.l.b16 %v538
        %v635 = vunpack.c.l.b16 %v539
        %v636 = vunpack.c.l.b16 %v540
        %v637 = vunpack.c.l.b16 %v541
        %v638 = vunpack.c.l.b16 %v542
        %v639 = vunpack.c.l.b16 %v543
        %v640 = vunpack.c.l.b16 %v544
        %v641 = vunpack.c.l.b16 %v545
        %v642 = vunpack.c.l.b16 %v546
        %v643 = vunpack.c.l.b16 %v547
        %v644 = vunpack.c.l.b16 %v548
        %v645 = vunpack.c.l.b16 %v549
        %v646 = vunpack.c.l.b16 %v550
        %v647 = vunpack.c.l.b16 %v551
        %v648 = vunpack.c.l.b16 %v552
        %v649 = vunpack.c.l.b16 %v553
        %v650 = vunpack.c.l.b16 %v554
        %v651 = vunpack.c.l.b16 %v555
        %v652 = vunpack.c.l.b16 %v556
        %v653 = vunpack.c.l.b16 %v557
        %v654 = vunpack.c.l.b16 %v558
        %v655 = vunpack.c.l.b16 %v559
        %v656 = vunpack.c.l.b16 %v560
        %v657 = vunpack.c.l.b16 %v561
        %v658 = vunpack.c.l.b16 %v562
        %v659 = vunpack.c.l.b16 %v563
        %v660 = vunpack.c.l.b16 %v564
        %v661 = vunpack.c.l.b16 %v565
        %v662 = vpack.c.b16 %v631, %v630
        %v663 = vpack.c.b16 %v633, %v632
        %v664 = vpack.c.b16 %v635, %v634
        %v665 = vpack.c.b16 %v637, %v636
        %v666 = vpack.c.b16 %v639, %v638
        %v667 = vpack.c.b16 %v641, %v640
        %v668 = vpack.c.b16 %v643, %v642
        %v669 = vpack.c.b16 %v645, %v644
        %v670 = vpack.c.b16 %v647, %v646
        %v671 = vpack.c.b16 %v649, %v648
        %v672 = vpack.c.b16 %v651, %v650
        %v673 = vpack.c.b16 %v653, %v652
        %v674 = vpack.c.b16 %v655, %v654
        %v675 = vpack.c.b16 %v657, %v656
        %v676 = vpack.c.b16 %v659, %v658
        %v677 = vpack.c.b16 %v661, %v660
        %694 = vmatpush.bf16.msra.mxu0 %v669
        %695 = vmatpush.bf16.msra.mxu0 %v668
        %696 = vmatpush.bf16.msra.mxu0 %v667
        %697 = vmatpush.bf16.msra.mxu0 %v666
        %698 = vmatpush.bf16.msra.mxu0 %v665
        %699 = vmatpush.bf16.msra.mxu0 %v664
        %700 = vmatpush.bf16.msra.mxu0 %v663
        %701 = vmatpush.bf16.msra.mxu0 %v662
        %702 = vmatmul.bf16.gmra.mxu0 %v497
        %v703 = vpop.f32.mrf.mxu0
        %v704 = vadd.f32 0.0, %v703
        %v705 = vpop.f32.mrf.mxu0
        %v706 = vadd.f32 0.0, %v705
        %707 = vmatmul.bf16.gmra.mxu0 %v499
        %v708 = vpop.f32.mrf.mxu0
        %v709 = vadd.f32 0.0, %v708
        %v710 = vpop.f32.mrf.mxu0
        %v711 = vadd.f32 0.0, %v710
        %712 = vmatmul.bf16.gmra.mxu0 %v501
        %v713 = vpop.f32.mrf.mxu0
        %v714 = vadd.f32 0.0, %v713
        %v715 = vpop.f32.mrf.mxu0
        %v716 = vadd.f32 0.0, %v715
        %717 = vmatmul.bf16.gmra.mxu0 %v503
        %v718 = vpop.f32.mrf.mxu0
        %v719 = vadd.f32 0.0, %v718
        %v720 = vpop.f32.mrf.mxu0
        %v721 = vadd.f32 0.0, %v720
        %722 = vmatmul.bf16.gmra.mxu0 %v505
        %v723 = vpop.f32.mrf.mxu0
        %v724 = vadd.f32 0.0, %v723
        %v725 = vpop.f32.mrf.mxu0
        %v726 = vadd.f32 0.0, %v725
        %727 = vmatmul.bf16.gmra.mxu0 %v507
        %v728 = vpop.f32.mrf.mxu0
        %v729 = vadd.f32 0.0, %v728
        %v730 = vpop.f32.mrf.mxu0
        %v731 = vadd.f32 0.0, %v730
        %732 = vmatmul.bf16.gmra.mxu0 %v509
        %v733 = vpop.f32.mrf.mxu0
        %v734 = vadd.f32 0.0, %v733
        %v735 = vpop.f32.mrf.mxu0
        %v736 = vadd.f32 0.0, %v735
        %737 = vmatmul.bf16.gmra.mxu0 %v511
        %v738 = vpop.f32.mrf.mxu0
        %v739 = vadd.f32 0.0, %v738
        %v740 = vpop.f32.mrf.mxu0
        %v741 = vadd.f32 0.0, %v740
        %742 = vmatmul.bf16.gmra.mxu0 %v513
        %v743 = vpop.f32.mrf.mxu0
        %v744 = vadd.f32 0.0, %v743
        %v745 = vpop.f32.mrf.mxu0
        %v746 = vadd.f32 0.0, %v745
        %747 = vmatmul.bf16.gmra.mxu0 %v515
        %v748 = vpop.f32.mrf.mxu0
        %v749 = vadd.f32 0.0, %v748
        %v750 = vpop.f32.mrf.mxu0
        %v751 = vadd.f32 0.0, %v750
        %752 = vmatmul.bf16.gmra.mxu0 %v517
        %v753 = vpop.f32.mrf.mxu0
        %v754 = vadd.f32 0.0, %v753
        %v755 = vpop.f32.mrf.mxu0
        %v756 = vadd.f32 0.0, %v755
        %757 = vmatmul.bf16.gmra.mxu0 %v519
        %v758 = vpop.f32.mrf.mxu0
        %v759 = vadd.f32 0.0, %v758
        %v760 = vpop.f32.mrf.mxu0
        %v761 = vadd.f32 0.0, %v760
        %762 = vmatmul.bf16.gmra.mxu0 %v521
        %v763 = vpop.f32.mrf.mxu0
        %v764 = vadd.f32 0.0, %v763
        %v765 = vpop.f32.mrf.mxu0
        %v766 = vadd.f32 0.0, %v765
        %767 = vmatmul.bf16.gmra.mxu0 %v523
        %v768 = vpop.f32.mrf.mxu0
        %v769 = vadd.f32 0.0, %v768
        %v770 = vpop.f32.mrf.mxu0
        %v771 = vadd.f32 0.0, %v770
        %772 = vmatmul.bf16.gmra.mxu0 %v525
        %v773 = vpop.f32.mrf.mxu0
        %v774 = vadd.f32 0.0, %v773
        %v775 = vpop.f32.mrf.mxu0
        %v776 = vadd.f32 0.0, %v775
        %777 = vmatmul.bf16.gmra.mxu0 %v527
        %v778 = vpop.f32.mrf.mxu0
        %v779 = vadd.f32 0.0, %v778
        %v780 = vpop.f32.mrf.mxu0
        %v781 = vadd.f32 0.0, %v780
        %782 = vdwg.mxu0
        %783 = vmatpush.bf16.msra.mxu0 %v677
        %784 = vmatpush.bf16.msra.mxu0 %v676
        %785 = vmatpush.bf16.msra.mxu0 %v675
        %786 = vmatpush.bf16.msra.mxu0 %v674
        %787 = vmatpush.bf16.msra.mxu0 %v673
        %788 = vmatpush.bf16.msra.mxu0 %v672
        %789 = vmatpush.bf16.msra.mxu0 %v671
        %790 = vmatpush.bf16.msra.mxu0 %v670
        %791 = vmatmul.bf16.gmra.mxu0 %v498
        %v792 = vpop.f32.mrf.mxu0
        %v793 = vadd.f32 %v704, %v792
        %v794 = vpop.f32.mrf.mxu0
        %v795 = vadd.f32 %v706, %v794
        %796 = vmatmul.bf16.gmra.mxu0 %v500
        %v797 = vpop.f32.mrf.mxu0
        %v798 = vadd.f32 %v709, %v797
        %v799 = vpop.f32.mrf.mxu0
        %v800 = vadd.f32 %v711, %v799
        %801 = vmatmul.bf16.gmra.mxu0 %v502
        %v802 = vpop.f32.mrf.mxu0
        %v803 = vadd.f32 %v714, %v802
        %v804 = vpop.f32.mrf.mxu0
        %v805 = vadd.f32 %v716, %v804
        %806 = vmatmul.bf16.gmra.mxu0 %v504
        %v807 = vpop.f32.mrf.mxu0
        %v808 = vadd.f32 %v719, %v807
        %v809 = vpop.f32.mrf.mxu0
        %v810 = vadd.f32 %v721, %v809
        %811 = vmatmul.bf16.gmra.mxu0 %v506
        %v812 = vpop.f32.mrf.mxu0
        %v813 = vadd.f32 %v724, %v812
        %v814 = vpop.f32.mrf.mxu0
        %v815 = vadd.f32 %v726, %v814
        %816 = vmatmul.bf16.gmra.mxu0 %v508
        %v817 = vpop.f32.mrf.mxu0
        %v818 = vadd.f32 %v729, %v817
        %v819 = vpop.f32.mrf.mxu0
        %v820 = vadd.f32 %v731, %v819
        %821 = vmatmul.bf16.gmra.mxu0 %v510
        %v822 = vpop.f32.mrf.mxu0
        %v823 = vadd.f32 %v734, %v822
        %v824 = vpop.f32.mrf.mxu0
        %v825 = vadd.f32 %v736, %v824
        %826 = vmatmul.bf16.gmra.mxu0 %v512
        %v827 = vpop.f32.mrf.mxu0
        %v828 = vadd.f32 %v739, %v827
        %v829 = vpop.f32.mrf.mxu0
        %v830 = vadd.f32 %v741, %v829
        %831 = vmatmul.bf16.gmra.mxu0 %v514
        %v832 = vpop.f32.mrf.mxu0
        %v833 = vadd.f32 %v744, %v832
        %v834 = vpop.f32.mrf.mxu0
        %v835 = vadd.f32 %v746, %v834
        %836 = vmatmul.bf16.gmra.mxu0 %v516
        %v837 = vpop.f32.mrf.mxu0
        %v838 = vadd.f32 %v749, %v837
        %v839 = vpop.f32.mrf.mxu0
        %v840 = vadd.f32 %v751, %v839
        %841 = vmatmul.bf16.gmra.mxu0 %v518
        %v842 = vpop.f32.mrf.mxu0
        %v843 = vadd.f32 %v754, %v842
        %v844 = vpop.f32.mrf.mxu0
        %v845 = vadd.f32 %v756, %v844
        %846 = vmatmul.bf16.gmra.mxu0 %v520
        %v847 = vpop.f32.mrf.mxu0
        %v848 = vadd.f32 %v759, %v847
        %v849 = vpop.f32.mrf.mxu0
        %v850 = vadd.f32 %v761, %v849
        %851 = vmatmul.bf16.gmra.mxu0 %v522
        %v852 = vpop.f32.mrf.mxu0
        %v853 = vadd.f32 %v764, %v852
        %v854 = vpop.f32.mrf.mxu0
        %v855 = vadd.f32 %v766, %v854
        %856 = vmatmul.bf16.gmra.mxu0 %v524
        %v857 = vpop.f32.mrf.mxu0
        %v858 = vadd.f32 %v769, %v857
        %v859 = vpop.f32.mrf.mxu0
        %v860 = vadd.f32 %v771, %v859
        %861 = vmatmul.bf16.gmra.mxu0 %v526
        %v862 = vpop.f32.mrf.mxu0
        %v863 = vadd.f32 %v774, %v862
        %v864 = vpop.f32.mrf.mxu0
        %v865 = vadd.f32 %v776, %v864
        %866 = vmatmul.bf16.gmra.mxu0 %v528
        %v867 = vpop.f32.mrf.mxu0
        %v868 = vadd.f32 %v779, %v867
        %v869 = vpop.f32.mrf.mxu0
        %v870 = vadd.f32 %v781, %v869
        %871 = vdwg.mxu0
        %v872 = vadd.f32 %v566, %v793
        %v873 = vadd.f32 %v567, %v795
        %v874 = vadd.f32 %v568, %v798
        %v875 = vadd.f32 %v569, %v800
        %v876 = vadd.f32 %v570, %v803
        %v877 = vadd.f32 %v571, %v805
        %v878 = vadd.f32 %v572, %v808
        %v879 = vadd.f32 %v573, %v810
        %v880 = vadd.f32 %v574, %v813
        %v881 = vadd.f32 %v575, %v815
        %v882 = vadd.f32 %v576, %v818
        %v883 = vadd.f32 %v577, %v820
        %v884 = vadd.f32 %v578, %v823
        %v885 = vadd.f32 %v579, %v825
        %v886 = vadd.f32 %v580, %v828
        %v887 = vadd.f32 %v581, %v830
        %v888 = vadd.f32 %v582, %v833
        %v889 = vadd.f32 %v583, %v835
        %v890 = vadd.f32 %v584, %v838
        %v891 = vadd.f32 %v585, %v840
        %v892 = vadd.f32 %v586, %v843
        %v893 = vadd.f32 %v587, %v845
        %v894 = vadd.f32 %v588, %v848
        %v895 = vadd.f32 %v589, %v850
        %v896 = vadd.f32 %v590, %v853
        %v897 = vadd.f32 %v591, %v855
        %v898 = vadd.f32 %v592, %v858
        %v899 = vadd.f32 %v593, %v860
        %v900 = vadd.f32 %v594, %v863
        %v901 = vadd.f32 %v595, %v865
        %v902 = vadd.f32 %v596, %v868
        %v903 = vadd.f32 %v597, %v870
        %904 = vst [vmem:[#allocation2] sm:$0xff] %v872
        %905 = vst [vmem:[#allocation2 + $0x8] sm:$0xff] %v873
        %906 = vst [vmem:[#allocation2 + $0x10] sm:$0xff] %v874
        %907 = vst [vmem:[#allocation2 + $0x18] sm:$0xff] %v875
        %908 = vst [vmem:[#allocation2 + $0x20] sm:$0xff] %v876
        %909 = vst [vmem:[#allocation2 + $0x28] sm:$0xff] %v877
        %910 = vst [vmem:[#allocation2 + $0x30] sm:$0xff] %v878
        %911 = vst [vmem:[#allocation2 + $0x38] sm:$0xff] %v879
        %912 = vst [vmem:[#allocation2 + $0x40] sm:$0xff] %v880
        %913 = vst [vmem:[#allocation2 + $0x48] sm:$0xff] %v881
        %914 = vst [vmem:[#allocation2 + $0x50] sm:$0xff] %v882
        %915 = vst [vmem:[#allocation2 + $0x58] sm:$0xff] %v883
        %916 = vst [vmem:[#allocation2 + $0x60] sm:$0xff] %v884
        %917 = vst [vmem:[#allocation2 + $0x68] sm:$0xff] %v885
        %918 = vst [vmem:[#allocation2 + $0x70] sm:$0xff] %v886
        %919 = vst [vmem:[#allocation2 + $0x78] sm:$0xff] %v887
        %920 = vst [vmem:[#allocation2 + $0x80] sm:$0xff] %v888
        %921 = vst [vmem:[#allocation2 + $0x88] sm:$0xff] %v889
        %922 = vst [vmem:[#allocation2 + $0x90] sm:$0xff] %v890
        %923 = vst [vmem:[#allocation2 + $0x98] sm:$0xff] %v891
        %924 = vst [vmem:[#allocation2 + $0xa0] sm:$0xff] %v892
        %925 = vst [vmem:[#allocation2 + $0xa8] sm:$0xff] %v893
        %926 = vst [vmem:[#allocation2 + $0xb0] sm:$0xff] %v894
        %927 = vst [vmem:[#allocation2 + $0xb8] sm:$0xff] %v895
        %928 = vst [vmem:[#allocation2 + $0xc0] sm:$0xff] %v896
        %929 = vst [vmem:[#allocation2 + $0xc8] sm:$0xff] %v897
        %930 = vst [vmem:[#allocation2 + $0xd0] sm:$0xff] %v898
        %931 = vst [vmem:[#allocation2 + $0xd8] sm:$0xff] %v899
        %932 = vst [vmem:[#allocation2 + $0xe0] sm:$0xff] %v900
        %933 = vst [vmem:[#allocation2 + $0xe8] sm:$0xff] %v901
        %934 = vst [vmem:[#allocation2 + $0xf0] sm:$0xff] %v902
        %935 = vst [vmem:[#allocation2 + $0xf8] sm:$0xff] %v903
        %p936 = scmp.eq.s32.totalorder %s21, 1
        // Predicated region
        $region68: #{sgc_net_forward.3} parent=58 // pred_check
          %p937 = pneg %p936
        $region69: #{sgc_net_forward.3} parent=58 // pred_check_branch
          %939 = sbr.rel (%p937) target = $region71
        $region70: #{sgc_net_forward.3} parent=58 // pred_region
          %v940 = vld [vmem:[#allocation2] sm:$0xff]
          %v941 = vld [vmem:[#allocation2 + $0x8] sm:$0xff]
          %v942 = vld [vmem:[#allocation2 + $0x10] sm:$0xff]
          %v943 = vld [vmem:[#allocation2 + $0x18] sm:$0xff]
          %v944 = vld [vmem:[#allocation2 + $0x20] sm:$0xff]
          %v945 = vld [vmem:[#allocation2 + $0x28] sm:$0xff]
          %v946 = vld [vmem:[#allocation2 + $0x30] sm:$0xff]
          %v947 = vld [vmem:[#allocation2 + $0x38] sm:$0xff]
          %v948 = vld [vmem:[#allocation2 + $0x40] sm:$0xff]
          %v949 = vld [vmem:[#allocation2 + $0x48] sm:$0xff]
          %v950 = vld [vmem:[#allocation2 + $0x50] sm:$0xff]
          %v951 = vld [vmem:[#allocation2 + $0x58] sm:$0xff]
          %v952 = vld [vmem:[#allocation2 + $0x60] sm:$0xff]
          %v953 = vld [vmem:[#allocation2 + $0x68] sm:$0xff]
          %v954 = vld [vmem:[#allocation2 + $0x70] sm:$0xff]
          %v955 = vld [vmem:[#allocation2 + $0x78] sm:$0xff]
          %v956 = vld [vmem:[#allocation2 + $0x80] sm:$0xff]
          %v957 = vld [vmem:[#allocation2 + $0x88] sm:$0xff]
          %v958 = vld [vmem:[#allocation2 + $0x90] sm:$0xff]
          %v959 = vld [vmem:[#allocation2 + $0x98] sm:$0xff]
          %v960 = vld [vmem:[#allocation2 + $0xa0] sm:$0xff]
          %v961 = vld [vmem:[#allocation2 + $0xa8] sm:$0xff]
          %v962 = vld [vmem:[#allocation2 + $0xb0] sm:$0xff]
          %v963 = vld [vmem:[#allocation2 + $0xb8] sm:$0xff]
          %v964 = vld [vmem:[#allocation2 + $0xc0] sm:$0xff]
          %v965 = vld [vmem:[#allocation2 + $0xc8] sm:$0xff]
          %v966 = vld [vmem:[#allocation2 + $0xd0] sm:$0xff]
          %v967 = vld [vmem:[#allocation2 + $0xd8] sm:$0xff]
          %v968 = vld [vmem:[#allocation2 + $0xe0] sm:$0xff]
          %v969 = vld [vmem:[#allocation2 + $0xe8] sm:$0xff]
          %v970 = vld [vmem:[#allocation2 + $0xf0] sm:$0xff]
          %v971 = vld [vmem:[#allocation2 + $0xf8] sm:$0xff]
          %v972 = vld [vmem:[%s309] sm:$0xff]
          %v973 = vld [vmem:[%s309 + $0x8] sm:$0xff]
          %v974 = vld [vmem:[%s309 + $0x10] sm:$0xff]
          %v975 = vld [vmem:[%s309 + $0x18] sm:$0xff]
          %v976 = vld [vmem:[%s309 + $0x20] sm:$0xff]
          %v977 = vld [vmem:[%s309 + $0x28] sm:$0xff]
          %v978 = vld [vmem:[%s309 + $0x30] sm:$0xff]
          %v979 = vld [vmem:[%s309 + $0x38] sm:$0xff]
          %v980 = vld [vmem:[%s309 + $0x40] sm:$0xff]
          %v981 = vld [vmem:[%s309 + $0x48] sm:$0xff]
          %v982 = vld [vmem:[%s309 + $0x50] sm:$0xff]
          %v983 = vld [vmem:[%s309 + $0x58] sm:$0xff]
          %v984 = vld [vmem:[%s309 + $0x60] sm:$0xff]
          %v985 = vld [vmem:[%s309 + $0x68] sm:$0xff]
          %v986 = vld [vmem:[%s309 + $0x70] sm:$0xff]
          %v987 = vld [vmem:[%s309 + $0x78] sm:$0xff]
          %v988 = vld [vmem:[%s309 + $0x80] sm:$0xff]
          %v989 = vld [vmem:[%s309 + $0x88] sm:$0xff]
          %v990 = vld [vmem:[%s309 + $0x90] sm:$0xff]
          %v991 = vld [vmem:[%s309 + $0x98] sm:$0xff]
          %v992 = vld [vmem:[%s309 + $0xa0] sm:$0xff]
          %v993 = vld [vmem:[%s309 + $0xa8] sm:$0xff]
          %v994 = vld [vmem:[%s309 + $0xb0] sm:$0xff]
          %v995 = vld [vmem:[%s309 + $0xb8] sm:$0xff]
          %v996 = vld [vmem:[%s309 + $0xc0] sm:$0xff]
          %v997 = vld [vmem:[%s309 + $0xc8] sm:$0xff]
          %v998 = vld [vmem:[%s309 + $0xd0] sm:$0xff]
          %v999 = vld [vmem:[%s309 + $0xd8] sm:$0xff]
          %v1000 = vld [vmem:[%s309 + $0xe0] sm:$0xff]
          %v1001 = vld [vmem:[%s309 + $0xe8] sm:$0xff]
          %v1002 = vld [vmem:[%s309 + $0xf0] sm:$0xff]
          %v1003 = vld [vmem:[%s309 + $0xf8] sm:$0xff]
          %1005 = vset.pattern.permute.xlu0 0
          %1006 = vperm.xlu0 %1005, %v972
          %v1007 = vpop.permute.xlu0 %1006
          %1010 = vset.pattern.permute.xlu0 0
          %1011 = vperm.xlu0 %1010, %v973
          %v1012 = vpop.permute.xlu0 %1011
          %1015 = vset.pattern.permute.xlu0 0
          %1016 = vperm.xlu0 %1015, %v974
          %v1017 = vpop.permute.xlu0 %1016
          %1020 = vset.pattern.permute.xlu0 0
          %1021 = vperm.xlu0 %1020, %v975
          %v1022 = vpop.permute.xlu0 %1021
          %1025 = vset.pattern.permute.xlu0 0
          %1026 = vperm.xlu0 %1025, %v976
          %v1027 = vpop.permute.xlu0 %1026
          %1030 = vset.pattern.permute.xlu0 0
          %1031 = vperm.xlu0 %1030, %v977
          %v1032 = vpop.permute.xlu0 %1031
          %1035 = vset.pattern.permute.xlu0 0
          %1036 = vperm.xlu0 %1035, %v978
          %v1037 = vpop.permute.xlu0 %1036
          %1040 = vset.pattern.permute.xlu0 0
          %1041 = vperm.xlu0 %1040, %v979
          %v1042 = vpop.permute.xlu0 %1041
          %1045 = vset.pattern.permute.xlu0 0
          %1046 = vperm.xlu0 %1045, %v980
          %v1047 = vpop.permute.xlu0 %1046
          %1050 = vset.pattern.permute.xlu0 0
          %1051 = vperm.xlu0 %1050, %v981
          %v1052 = vpop.permute.xlu0 %1051
          %1055 = vset.pattern.permute.xlu0 0
          %1056 = vperm.xlu0 %1055, %v982
          %v1057 = vpop.permute.xlu0 %1056
          %1060 = vset.pattern.permute.xlu0 0
          %1061 = vperm.xlu0 %1060, %v983
          %v1062 = vpop.permute.xlu0 %1061
          %1065 = vset.pattern.permute.xlu0 0
          %1066 = vperm.xlu0 %1065, %v984
          %v1067 = vpop.permute.xlu0 %1066
          %1070 = vset.pattern.permute.xlu0 0
          %1071 = vperm.xlu0 %1070, %v985
          %v1072 = vpop.permute.xlu0 %1071
          %1075 = vset.pattern.permute.xlu0 0
          %1076 = vperm.xlu0 %1075, %v986
          %v1077 = vpop.permute.xlu0 %1076
          %1080 = vset.pattern.permute.xlu0 0
          %1081 = vperm.xlu0 %1080, %v987
          %v1082 = vpop.permute.xlu0 %1081
          %1085 = vset.pattern.permute.xlu0 0
          %1086 = vperm.xlu0 %1085, %v988
          %v1087 = vpop.permute.xlu0 %1086
          %1090 = vset.pattern.permute.xlu0 0
          %1091 = vperm.xlu0 %1090, %v989
          %v1092 = vpop.permute.xlu0 %1091
          %1095 = vset.pattern.permute.xlu0 0
          %1096 = vperm.xlu0 %1095, %v990
          %v1097 = vpop.permute.xlu0 %1096
          %1100 = vset.pattern.permute.xlu0 0
          %1101 = vperm.xlu0 %1100, %v991
          %v1102 = vpop.permute.xlu0 %1101
          %1105 = vset.pattern.permute.xlu0 0
          %1106 = vperm.xlu0 %1105, %v992
          %v1107 = vpop.permute.xlu0 %1106
          %1110 = vset.pattern.permute.xlu0 0
          %1111 = vperm.xlu0 %1110, %v993
          %v1112 = vpop.permute.xlu0 %1111
          %1115 = vset.pattern.permute.xlu0 0
          %1116 = vperm.xlu0 %1115, %v994
          %v1117 = vpop.permute.xlu0 %1116
          %1120 = vset.pattern.permute.xlu0 0
          %1121 = vperm.xlu0 %1120, %v995
          %v1122 = vpop.permute.xlu0 %1121
          %1125 = vset.pattern.permute.xlu0 0
          %1126 = vperm.xlu0 %1125, %v996
          %v1127 = vpop.permute.xlu0 %1126
          %1130 = vset.pattern.permute.xlu0 0
          %1131 = vperm.xlu0 %1130, %v997
          %v1132 = vpop.permute.xlu0 %1131
          %1135 = vset.pattern.permute.xlu0 0
          %1136 = vperm.xlu0 %1135, %v998
          %v1137 = vpop.permute.xlu0 %1136
          %1140 = vset.pattern.permute.xlu0 0
          %1141 = vperm.xlu0 %1140, %v999
          %v1142 = vpop.permute.xlu0 %1141
          %1145 = vset.pattern.permute.xlu0 0
          %1146 = vperm.xlu0 %1145, %v1000
          %v1147 = vpop.permute.xlu0 %1146
          %1150 = vset.pattern.permute.xlu0 0
          %1151 = vperm.xlu0 %1150, %v1001
          %v1152 = vpop.permute.xlu0 %1151
          %1155 = vset.pattern.permute.xlu0 0
          %1156 = vperm.xlu0 %1155, %v1002
          %v1157 = vpop.permute.xlu0 %1156
          %1160 = vset.pattern.permute.xlu0 0
          %1161 = vperm.xlu0 %1160, %v1003
          %v1162 = vpop.permute.xlu0 %1161
          %v1164 = vmul.f32 %v940, %v1007
          %v1165 = vmul.f32 %v941, %v1012
          %v1166 = vmul.f32 %v942, %v1017
          %v1167 = vmul.f32 %v943, %v1022
          %v1168 = vmul.f32 %v944, %v1027
          %v1169 = vmul.f32 %v945, %v1032
          %v1170 = vmul.f32 %v946, %v1037
          %v1171 = vmul.f32 %v947, %v1042
          %v1172 = vmul.f32 %v948, %v1047
          %v1173 = vmul.f32 %v949, %v1052
          %v1174 = vmul.f32 %v950, %v1057
          %v1175 = vmul.f32 %v951, %v1062
          %v1176 = vmul.f32 %v952, %v1067
          %v1177 = vmul.f32 %v953, %v1072
          %v1178 = vmul.f32 %v954, %v1077
          %v1179 = vmul.f32 %v955, %v1082
          %v1180 = vmul.f32 %v956, %v1087
          %v1181 = vmul.f32 %v957, %v1092
          %v1182 = vmul.f32 %v958, %v1097
          %v1183 = vmul.f32 %v959, %v1102
          %v1184 = vmul.f32 %v960, %v1107
          %v1185 = vmul.f32 %v961, %v1112
          %v1186 = vmul.f32 %v962, %v1117
          %v1187 = vmul.f32 %v963, %v1122
          %v1188 = vmul.f32 %v964, %v1127
          %v1189 = vmul.f32 %v965, %v1132
          %v1190 = vmul.f32 %v966, %v1137
          %v1191 = vmul.f32 %v967, %v1142
          %v1192 = vmul.f32 %v968, %v1147
          %v1193 = vmul.f32 %v969, %v1152
          %v1194 = vmul.f32 %v970, %v1157
          %v1195 = vmul.f32 %v971, %v1162
          %v1196 = vpack.c.bf16 %v1165, %v1164
          %v1197 = vpack.c.bf16 %v1167, %v1166
          %v1198 = vpack.c.bf16 %v1169, %v1168
          %v1199 = vpack.c.bf16 %v1171, %v1170
          %v1200 = vpack.c.bf16 %v1173, %v1172
          %v1201 = vpack.c.bf16 %v1175, %v1174
          %v1202 = vpack.c.bf16 %v1177, %v1176
          %v1203 = vpack.c.bf16 %v1179, %v1178
          %v1204 = vpack.c.bf16 %v1181, %v1180
          %v1205 = vpack.c.bf16 %v1183, %v1182
          %v1206 = vpack.c.bf16 %v1185, %v1184
          %v1207 = vpack.c.bf16 %v1187, %v1186
          %v1208 = vpack.c.bf16 %v1189, %v1188
          %v1209 = vpack.c.bf16 %v1191, %v1190
          %v1210 = vpack.c.bf16 %v1193, %v1192
          %v1211 = vpack.c.bf16 %v1195, %v1194
          %v1212 = vld [vmem:[%s3] sm:$0xf]
          %v1213 = vld [vmem:[%s3 + $0x4] sm:$0xf]
          %v1214 = vld [vmem:[%s3 + $0x8] sm:$0xf]
          %v1215 = vld [vmem:[%s3 + $0xc] sm:$0xf]
          %v1216 = vld [vmem:[%s3 + $0x10] sm:$0xf]
          %v1217 = vld [vmem:[%s3 + $0x14] sm:$0xf]
          %v1218 = vld [vmem:[%s3 + $0x18] sm:$0xf]
          %v1219 = vld [vmem:[%s3 + $0x1c] sm:$0xf]
          %v1220 = vld [vmem:[%s3 + $0x20] sm:$0xf]
          %v1221 = vld [vmem:[%s3 + $0x24] sm:$0xf]
          %v1222 = vld [vmem:[%s3 + $0x28] sm:$0xf]
          %v1223 = vld [vmem:[%s3 + $0x2c] sm:$0xf]
          %v1224 = vld [vmem:[%s3 + $0x30] sm:$0xf]
          %v1225 = vld [vmem:[%s3 + $0x34] sm:$0xf]
          %v1226 = vld [vmem:[%s3 + $0x38] sm:$0xf]
          %v1227 = vld [vmem:[%s3 + $0x3c] sm:$0xf]
          %v1228 = vld [vmem:[%s4] sm:$0x1]
          %v1230 = vperm.slane %v1228, 0
          %v1248 = vunpack.c.l.b16 %v1212
          %v1249 = vunpack.c.l.b16 %v1213
          %v1250 = vunpack.c.l.b16 %v1214
          %v1251 = vunpack.c.l.b16 %v1215
          %v1252 = vunpack.c.l.b16 %v1216
          %v1253 = vunpack.c.l.b16 %v1217
          %v1254 = vunpack.c.l.b16 %v1218
          %v1255 = vunpack.c.l.b16 %v1219
          %v1256 = vunpack.c.l.b16 %v1220
          %v1257 = vunpack.c.l.b16 %v1221
          %v1258 = vunpack.c.l.b16 %v1222
          %v1259 = vunpack.c.l.b16 %v1223
          %v1260 = vunpack.c.l.b16 %v1224
          %v1261 = vunpack.c.l.b16 %v1225
          %v1262 = vunpack.c.l.b16 %v1226
          %v1263 = vunpack.c.l.b16 %v1227
          %v1264 = vpack.c.b16 %v1249, %v1248
          %v1265 = vpack.c.b16 %v1251, %v1250
          %v1266 = vpack.c.b16 %v1253, %v1252
          %v1267 = vpack.c.b16 %v1255, %v1254
          %v1268 = vpack.c.b16 %v1257, %v1256
          %v1269 = vpack.c.b16 %v1259, %v1258
          %v1270 = vpack.c.b16 %v1261, %v1260
          %v1271 = vpack.c.b16 %v1263, %v1262
          %1280 = vmatpush.bf16.msra.mxu0 %v1271
          %1281 = vmatpush.bf16.msra.mxu0 %v1270
          %1282 = vmatpush.bf16.msra.mxu0 %v1269
          %1283 = vmatpush.bf16.msra.mxu0 %v1268
          %1284 = vmatpush.bf16.msra.mxu0 %v1267
          %1285 = vmatpush.bf16.msra.mxu0 %v1266
          %1286 = vmatpush.bf16.msra.mxu0 %v1265
          %1287 = vmatpush.bf16.msra.mxu0 %v1264
          %1288 = vmatmul.bf16.gmra.mxu0 %v1196
          %v1289 = vpop.f32.mrf.mxu0
          %v1290 = vadd.f32 %v1230, %v1289
          %v1291 = vpop.f32.mrf.mxu0
          %v1292 = vadd.f32 %v1230, %v1291
          %1293 = vmatmul.bf16.gmra.mxu0 %v1197
          %v1294 = vpop.f32.mrf.mxu0
          %v1295 = vadd.f32 %v1230, %v1294
          %v1296 = vpop.f32.mrf.mxu0
          %v1297 = vadd.f32 %v1230, %v1296
          %1298 = vmatmul.bf16.gmra.mxu0 %v1198
          %v1299 = vpop.f32.mrf.mxu0
          %v1300 = vadd.f32 %v1230, %v1299
          %v1301 = vpop.f32.mrf.mxu0
          %v1302 = vadd.f32 %v1230, %v1301
          %1303 = vmatmul.bf16.gmra.mxu0 %v1199
          %v1304 = vpop.f32.mrf.mxu0
          %v1305 = vadd.f32 %v1230, %v1304
          %v1306 = vpop.f32.mrf.mxu0
          %v1307 = vadd.f32 %v1230, %v1306
          %1308 = vmatmul.bf16.gmra.mxu0 %v1200
          %v1309 = vpop.f32.mrf.mxu0
          %v1310 = vadd.f32 %v1230, %v1309
          %v1311 = vpop.f32.mrf.mxu0
          %v1312 = vadd.f32 %v1230, %v1311
          %1313 = vmatmul.bf16.gmra.mxu0 %v1201
          %v1314 = vpop.f32.mrf.mxu0
          %v1315 = vadd.f32 %v1230, %v1314
          %v1316 = vpop.f32.mrf.mxu0
          %v1317 = vadd.f32 %v1230, %v1316
          %1318 = vmatmul.bf16.gmra.mxu0 %v1202
          %v1319 = vpop.f32.mrf.mxu0
          %v1320 = vadd.f32 %v1230, %v1319
          %v1321 = vpop.f32.mrf.mxu0
          %v1322 = vadd.f32 %v1230, %v1321
          %1323 = vmatmul.bf16.gmra.mxu0 %v1203
          %v1324 = vpop.f32.mrf.mxu0
          %v1325 = vadd.f32 %v1230, %v1324
          %v1326 = vpop.f32.mrf.mxu0
          %v1327 = vadd.f32 %v1230, %v1326
          %1328 = vmatmul.bf16.gmra.mxu0 %v1204
          %v1329 = vpop.f32.mrf.mxu0
          %v1330 = vadd.f32 %v1230, %v1329
          %v1331 = vpop.f32.mrf.mxu0
          %v1332 = vadd.f32 %v1230, %v1331
          %1333 = vmatmul.bf16.gmra.mxu0 %v1205
          %v1334 = vpop.f32.mrf.mxu0
          %v1335 = vadd.f32 %v1230, %v1334
          %v1336 = vpop.f32.mrf.mxu0
          %v1337 = vadd.f32 %v1230, %v1336
          %1338 = vmatmul.bf16.gmra.mxu0 %v1206
          %v1339 = vpop.f32.mrf.mxu0
          %v1340 = vadd.f32 %v1230, %v1339
          %v1341 = vpop.f32.mrf.mxu0
          %v1342 = vadd.f32 %v1230, %v1341
          %1343 = vmatmul.bf16.gmra.mxu0 %v1207
          %v1344 = vpop.f32.mrf.mxu0
          %v1345 = vadd.f32 %v1230, %v1344
          %v1346 = vpop.f32.mrf.mxu0
          %v1347 = vadd.f32 %v1230, %v1346
          %1348 = vmatmul.bf16.gmra.mxu0 %v1208
          %v1349 = vpop.f32.mrf.mxu0
          %v1350 = vadd.f32 %v1230, %v1349
          %v1351 = vpop.f32.mrf.mxu0
          %v1352 = vadd.f32 %v1230, %v1351
          %1353 = vmatmul.bf16.gmra.mxu0 %v1209
          %v1354 = vpop.f32.mrf.mxu0
          %v1355 = vadd.f32 %v1230, %v1354
          %v1356 = vpop.f32.mrf.mxu0
          %v1357 = vadd.f32 %v1230, %v1356
          %1358 = vmatmul.bf16.gmra.mxu0 %v1210
          %v1359 = vpop.f32.mrf.mxu0
          %v1360 = vadd.f32 %v1230, %v1359
          %v1361 = vpop.f32.mrf.mxu0
          %v1362 = vadd.f32 %v1230, %v1361
          %1363 = vmatmul.bf16.gmra.mxu0 %v1211
          %v1364 = vpop.f32.mrf.mxu0
          %v1365 = vadd.f32 %v1230, %v1364
          %v1366 = vpop.f32.mrf.mxu0
          %v1367 = vadd.f32 %v1230, %v1366
          %1368 = vdwg.mxu0
          %1369 = vst [vmem:[%s315] sm:$0xff] %v1290
          %1370 = vst [vmem:[%s315 + $0x8] sm:$0xff] %v1292
          %1371 = vst [vmem:[%s315 + $0x10] sm:$0xff] %v1295
          %1372 = vst [vmem:[%s315 + $0x18] sm:$0xff] %v1297
          %1373 = vst [vmem:[%s315 + $0x20] sm:$0xff] %v1300
          %1374 = vst [vmem:[%s315 + $0x28] sm:$0xff] %v1302
          %1375 = vst [vmem:[%s315 + $0x30] sm:$0xff] %v1305
          %1376 = vst [vmem:[%s315 + $0x38] sm:$0xff] %v1307
          %1377 = vst [vmem:[%s315 + $0x40] sm:$0xff] %v1310
          %1378 = vst [vmem:[%s315 + $0x48] sm:$0xff] %v1312
          %1379 = vst [vmem:[%s315 + $0x50] sm:$0xff] %v1315
          %1380 = vst [vmem:[%s315 + $0x58] sm:$0xff] %v1317
          %1381 = vst [vmem:[%s315 + $0x60] sm:$0xff] %v1320
          %1382 = vst [vmem:[%s315 + $0x68] sm:$0xff] %v1322
          %1383 = vst [vmem:[%s315 + $0x70] sm:$0xff] %v1325
          %1384 = vst [vmem:[%s315 + $0x78] sm:$0xff] %v1327
          %1385 = vst [vmem:[%s315 + $0x80] sm:$0xff] %v1330
          %1386 = vst [vmem:[%s315 + $0x88] sm:$0xff] %v1332
          %1387 = vst [vmem:[%s315 + $0x90] sm:$0xff] %v1335
          %1388 = vst [vmem:[%s315 + $0x98] sm:$0xff] %v1337
          %1389 = vst [vmem:[%s315 + $0xa0] sm:$0xff] %v1340
          %1390 = vst [vmem:[%s315 + $0xa8] sm:$0xff] %v1342
          %1391 = vst [vmem:[%s315 + $0xb0] sm:$0xff] %v1345
          %1392 = vst [vmem:[%s315 + $0xb8] sm:$0xff] %v1347
          %1393 = vst [vmem:[%s315 + $0xc0] sm:$0xff] %v1350
          %1394 = vst [vmem:[%s315 + $0xc8] sm:$0xff] %v1352
          %1395 = vst [vmem:[%s315 + $0xd0] sm:$0xff] %v1355
          %1396 = vst [vmem:[%s315 + $0xd8] sm:$0xff] %v1357
          %1397 = vst [vmem:[%s315 + $0xe0] sm:$0xff] %v1360
          %1398 = vst [vmem:[%s315 + $0xe8] sm:$0xff] %v1362
          %1399 = vst [vmem:[%s315 + $0xf0] sm:$0xff] %v1365
          %1400 = vst [vmem:[%s315 + $0xf8] sm:$0xff] %v1367
        $region71: #{sgc_net_forward.3} parent=58 // pred_fallthru
          _
        %s1401 = smul.u32 32, %s20
        %p1402 = scmp.lt.s32.totalorder %s1401, 63
        %s1403 = scalar_select %p1402, %s1401, 63
        %s1404 = smul.addr %s1403, 8
        %s1405 = scalar_lea.vmem %s5, %s1404
        // Predicated region
        $region72: #{sgc_net_forward.3} parent=58 // pred_check
          %p1406 = pneg %p163
        $region73: #{sgc_net_forward.3} parent=58 // pred_check_branch
          %1408 = sbr.rel (%p1406) target = $region75
        $region74: #{sgc_net_forward.3} parent=58 // pred_region
          %s1409 = smul.u32 32, %s20
        $region75: #{sgc_net_forward.3} parent=58 // pred_fallthru
          _
      $region59: #{sgc_net_forward.3} parent=5 // pred_fallthru
        _
      %p1410 = scmp.le.s32.totalorder 2, %s11
      // Predicated region
      $region76: #{sgc_net_forward.3} parent=5 // pred_check
        %p1411 = pneg %p1410
      $region77: #{sgc_net_forward.3} parent=5 // pred_check_branch
        %1413 = sbr.rel (%p1411) target = $region79
      $region78: #{sgc_net_forward.3} parent=5 // pred_region
        %s1414 = ssub.s32 %s11, 2
        // Predicated region
        $region80: #{sgc_net_forward.3} parent=78 // pred_check
          %p1415 = pneg %p169
        $region81: #{sgc_net_forward.3} parent=78 // pred_check_branch
          %1417 = sbr.rel (%p1415) target = $region83
        $region82: #{sgc_net_forward.3} parent=78 // pred_region
          %s1418 = smul.u32 32, %s22
          %p1419 = scmp.lt.s32.totalorder %s1418, 63
          %s1420 = scalar_select %p1419, %s1418, 63
          %s1421 = smul.addr %s1420, 8
          %s1422 = scalar_lea.vmem %s5, %s1421
        $region83: #{sgc_net_forward.3} parent=78 // pred_fallthru
          _
      $region79: #{sgc_net_forward.3} parent=5 // pred_fallthru
        _
    $region6: #{sgc_net_forward.3} parent=1 // loop_footer
      %s15 = sadd.s32 1, %s11
    $region7: #{sgc_net_forward.3} parent=1 // loop_footer_branch
      %10 = sbr.rel target = $region3
    $region8: #{sgc_net_forward.3} parent=1 // loop_exit
      _

</llo_original>
